<compile_context>
chip_gen: v7x
topology: tpu7x:2x2x1
jax: 0.10.0
libtpu: 0.0.40
codegen_flags: <defaults>
</compile_context>

<pallas_src>
import functools
import math

import jax
import jax.numpy as jnp
from jax.experimental import pallas as pl
from jax.experimental.pallas import tpu as pltpu

S_TEXT = 40   # text sequence length (forced by trs1/trs2 output dim = 40)
P_VIS = 49    # number of visual patches (trs1/trs2 input dim = 49)


@functools.lru_cache(maxsize=None)
def _exact_gelu_lowers():
  """True iff erf-based (exact) GELU lowers through Mosaic on this backend."""
  def k(x_ref, o_ref):
    o_ref[...] = jax.nn.gelu(x_ref[...], approximate=False)
  try:
    fn = pl.pallas_call(k, out_shape=jax.ShapeDtypeStruct((8, 128), jnp.float32))
    jax.jit(fn).lower(jax.ShapeDtypeStruct((8, 128), jnp.float32)).compile()
    return True
  except Exception:  # noqa: BLE001 - any lowering failure -> tanh fallback
    return False


def _mgmha_kernel(hs_ref, pkv_ref, mask_ref, wsq_ref, brow_ref, wtrs_ref, col_ref,
                  ctx_ref, *kv_refs, output_qks: bool, exact_gelu: bool):
  """One grid step = one batch tile, everything in a (rows, BT*H) lane layout.

  MXU operands stay in the packed (bf16) dtype; accumulation and all softmax/GELU math
  happens in f32.  Body order is chosen to keep live ranges short (early k/v stores).
  """
  f32 = jnp.float32
  S, BH = hs_ref.shape
  cdt = wsq_ref.dtype                         # MXU feed dtype (bf16)

  # Fused trs1/trs2 (Linear over the patch axis) + GELU, f32 math.
  t12 = jnp.dot(wtrs_ref[...], pkv_ref[...],
                preferred_element_type=f32) + col_ref[0:2 * S, :]
  # TODO(synk): falls back to tanh GELU only if erf does not lower on this Mosaic build.
  t12 = jax.nn.gelu(t12, approximate=not exact_gelu)
  t1 = t12[:S, :].astype(cdt)                 # gelu(trs1(pkv)) -> value path
  t2 = t12[S:, :].astype(cdt)                 # gelu(trs2(pkv)) -> key path

  # Value projection first; if k/v are requested, store them immediately.
  w_v = wsq_ref[2 * BH:3 * BH, :]
  v = jnp.dot(t1, w_v, preferred_element_type=f32) + brow_ref[2:3, :]      # (S, BH) f32
  if output_qks:
    w_k = wsq_ref[5 * BH:6 * BH, :]
    k = jnp.dot(t2, w_k, preferred_element_type=f32) + brow_ref[5:6, :]
    kv_refs[0][...] = k.astype(kv_refs[0].dtype)
    kv_refs[1][...] = v.astype(kv_refs[1].dtype)

  # Gate Bk = wqk(q(hs)) * wk(k(t2)); q/k projections are pre-folded with the per-head
  # wqk/wk linears into single block-diagonal matmuls.
  w_kf = wsq_ref[1 * BH:2 * BH, :]
  kw = jnp.dot(t2, w_kf, preferred_element_type=f32) + brow_ref[1:2, :]
  w_qf = wsq_ref[0 * BH:1 * BH, :]
  qw = jnp.dot(hs_ref[...], w_qf, preferred_element_type=f32) + brow_ref[0:1, :]
  bk = qw * kw                                                             # (S, BH) f32

  # "b" branch: per-head score (replicated across head_dim lanes), masked softmax over
  # the sequence axis (torch dim=-2).  Finished before the m-branch starts.
  w_bx = wsq_ref[3 * BH:4 * BH, :]
  b_sc = jnp.dot(bk.astype(cdt), w_bx, preferred_element_type=f32) + brow_ref[3:4, :]
  sb = b_sc + mask_ref[...]
  sb = sb - jnp.max(sb, axis=0, keepdims=True)
  eb = jnp.exp(sb)
  pb = eb * pl.reciprocal(jnp.sum(eb, axis=0, keepdims=True), approx=True)  # (S, BH)

  # "m" branch: wm reduces over the sequence axis -> one row; softmax over each head's
  # head_dim lane segment (torch dim=-1).  The additive mask is constant along head_dim
  # so it cancels exactly and is skipped; the single max over all lanes is a uniform
  # shift per segment -> exact (document: depends on the contiguous segment layout).
  m_row = jnp.sum(col_ref[2 * S:3 * S, :] * bk, axis=0, keepdims=True) + brow_ref[4:5, :]
  m_row = m_row - jnp.max(m_row, axis=1, keepdims=True)
  em = jnp.exp(m_row)                                                       # (1, BH)
  ones_seg = wsq_ref[4 * BH:5 * BH, :]                                      # block-diag ones
  seg_sum = jnp.dot(em.astype(cdt), ones_seg, preferred_element_type=f32)   # per-head sums
  pm = em * pl.reciprocal(seg_sum, approx=True)                             # (1, BH)

  ctx_ref[...] = ((pb + pm) * v).astype(ctx_ref.dtype)


def _tile_config(device=None):
  """Per-TPU-generation lane-width target.

  256-lane tiles feed the 256x256 MXUs of v6e/v7x; 128 lanes on v5e & older (a wider
  block-diag slab would only add zero matmul work there).  v7x keeps >= 2 grid steps so
  both TensorCores get work under dimension_semantics=("parallel",).
  """
  device = device or jax.devices()[0]
  kind = getattr(device, "device_kind", "").lower()
  wide = ("v6" in kind) or ("v7" in kind) or ("tpu7" in kind) or ("trillium" in kind)
  max_lanes = 256 if wide else 128
  min_grid_steps = 2 if (("v7" in kind) or ("tpu7" in kind)) else 1
  return max_lanes, min_grid_steps


def _choose_batch_tile(batch, hidden, max_lanes=128, min_grid_steps=1):
  """Largest batch tile BT with BT*hidden a multiple of 128 and <= max_lanes, keeping at
  least `min_grid_steps` grid steps when possible.  Never returns a tile whose lane width
  is not a multiple of 128 — the caller pads the batch instead."""
  req = max(1, 128 // math.gcd(hidden, 128))   # smallest BT giving 128-multiple lanes
  best = req
  bt = 2 * req
  while bt * hidden <= max_lanes:
    if -(-batch // bt) >= min_grid_steps:
      best = bt
    bt += req
  return best


def prepare_mgmha_params(params, num_heads, batch_tile, include_qks=True,
                         dtype=jnp.bfloat16):
  """One-time (cacheable) host-side weight folding / packing for a given batch tile.

  Packed tensors are stored in `dtype` (default bf16): the MXU rounds f32 operands to
  bf16 at default precision anyway, so this halves the dominant per-step DMA (the weight
  slab).  The folding itself is done in f32 at HIGHEST precision to avoid drift.
  """
  f32 = jnp.float32
  hp = jax.lax.Precision.HIGHEST
  H = params["q_w"].shape[0]
  dh = H // num_heads
  BT = batch_tile
  BH = BT * H

  eye_h = jnp.eye(num_heads, dtype=f32)
  bd_wqkT = jnp.kron(eye_h, params["wqk_w"].T.astype(f32))          # (H, H)
  bd_wkT = jnp.kron(eye_h, params["wk_w"].T.astype(f32))            # (H, H)

  mm = lambda a, b: jnp.matmul(a, b, precision=hp)
  w_qfold = mm(params["q_w"].T.astype(f32), bd_wqkT)                # q -> wqk folded
  b_qfold = mm(params["q_b"].astype(f32)[None], bd_wqkT)[0] \
      + jnp.tile(params["wqk_b"].astype(f32), num_heads)
  w_kfold = mm(params["k_w"].T.astype(f32), bd_wkT)                 # k -> wk folded
  b_kfold = mm(params["k_b"].astype(f32)[None], bd_wkT)[0] \
      + jnp.tile(params["wk_b"].astype(f32), num_heads)
  w_v = params["v_w"].T.astype(f32)
  b_v = params["v_b"].astype(f32)
  w_bexp = jnp.kron(eye_h, jnp.outer(params["wb_w"][0].astype(f32), jnp.ones((dh,), f32)))
  ones_seg = jnp.kron(eye_h, jnp.ones((dh, dh), f32))
  w_k = params["k_w"].T.astype(f32)
  b_k = params["k_b"].astype(f32)

  eye_bt = jnp.eye(BT, dtype=f32)
  bd = lambda m: jnp.kron(eye_bt, m)                                # block-diag over batch tile
  mats = [bd(w_qfold), bd(w_kfold), bd(w_v), bd(w_bexp), bd(ones_seg)]
  if include_qks:
    mats.append(bd(w_k))
  w_sq = jnp.concatenate(mats, axis=0).astype(dtype)                # (n*BH, BH)

  tile_b = lambda b: jnp.tile(b, BT)[None, :]                       # (1, BH)
  bias_rows = jnp.concatenate(
      [tile_b(b_qfold), tile_b(b_kfold), tile_b(b_v),
       jnp.full((1, BH), params["wb_b"].astype(f32)[0]),
       jnp.full((1, BH), params["wm_b"].astype(f32)[0]),
       tile_b(b_k)], axis=0).astype(dtype)                          # (6, BH)

  w_trs = jnp.concatenate([params["trs1_w"], params["trs2_w"]], axis=0).astype(dtype)  # (2S, P)
  S = params["trs1_w"].shape[0]
  col_vals = jnp.concatenate([params["trs1_b"], params["trs2_b"], params["wm_w"][0]],
                             axis=0).astype(f32)                    # (3S,)
  # Pre-broadcast to the full lane width on the host (a 1-lane VMEM tile pads to 128
  # lanes anyway) so the kernel never pays an in-body lane broadcast.
  col = jnp.broadcast_to(col_vals[:, None], (3 * S, BH)).astype(dtype)

  return dict(w_sq=w_sq, bias_rows=bias_rows, w_trs=w_trs, col=col,
              num_heads=num_heads, head_dim=dh, batch_tile=BT,
              include_qks=include_qks)


def mgmha_text_forward(hidden_states, past_key_values, attention_mask, prepared,
                       output_qks=False):
  """attention_mask: BERT-style additive mask of shape (B, 1, 1, S)."""
  # TODO(synk): output_attentions=True branch (returning per-head atten_output) not implemented.
  B, S, H = hidden_states.shape
  P = past_key_values.shape[1]
  nh, dh, BT = prepared["num_heads"], prepared["head_dim"], prepared["batch_tile"]
  assert S == S_TEXT and P == P_VIS and H == nh * dh
  if output_qks and not prepared["include_qks"]:
    raise ValueError("prepared params were built with include_qks=False")
  act_dt = prepared["w_sq"].dtype
  out_dt = hidden_states.dtype

  # Pad the batch to a tile multiple (never run with a non-128-multiple lane width).
  pad = (-B) % BT
  if pad:
    hidden_states = jnp.concatenate(
        [hidden_states, jnp.zeros((pad, S, H), hidden_states.dtype)], axis=0)
    past_key_values = jnp.concatenate(
        [past_key_values, jnp.zeros((pad, P, H), past_key_values.dtype)], axis=0)
    attention_mask = jnp.concatenate(
        [attention_mask, jnp.zeros((pad,) + attention_mask.shape[1:],
                                   attention_mask.dtype)], axis=0)
  Bp = B + pad
  BH = BT * H

  # Batch-along-lanes layouts; native dtype through the transpose, one cast to bf16.
  hs_bl = jnp.transpose(hidden_states, (1, 0, 2)).reshape(S, Bp * H).astype(act_dt)
  pkv_bl = jnp.transpose(past_key_values, (1, 0, 2)).reshape(P, Bp * H).astype(act_dt)
  mvals = attention_mask[:, 0, 0, :]                            # (Bp, S) additive mask
  mask_bl = jnp.repeat(mvals.T, H, axis=1).astype(act_dt)       # (S, Bp*H)

  n_sq = 6 if output_qks else 5
  n_out = 3 if output_qks else 1
  const = lambda shape: pl.BlockSpec(shape, lambda i: (0, 0))

  grid_spec = pltpu.PrefetchScalarGridSpec(
      num_scalar_prefetch=0,
      grid=(Bp // BT,),
      in_specs=[
          pl.BlockSpec((S, BH), lambda i: (0, i)),          # hidden states
          pl.BlockSpec((P, BH), lambda i: (0, i)),          # visual features
          pl.BlockSpec((S, BH), lambda i: (0, i)),          # additive mask
          const((n_sq * BH, BH)),                           # packed square weights (bf16)
          const((6, BH)),                                   # packed bias rows
          const((2 * S, P)),                                # fused trs1/trs2 weight
          const((3 * S, BH)),                               # trs biases + wm column (pre-broadcast)
      ],
      out_specs=[pl.BlockSpec((S, BH), lambda i: (0, i))] * n_out,
  )

  outs = pl.pallas_call(
      functools.partial(_mgmha_kernel, output_qks=output_qks,
                        exact_gelu=_exact_gelu_lowers()),
      out_shape=[jax.ShapeDtypeStruct((S, Bp * H), out_dt)] * n_out,
      grid_spec=grid_spec,
      compiler_params=pltpu.CompilerParams(dimension_semantics=("parallel",)),
  )(hs_bl, pkv_bl, mask_bl, prepared["w_sq"], prepared["bias_rows"],
    prepared["w_trs"], prepared["col"])

  ctx = outs[0].reshape(S, Bp, H)[:, :B].transpose(1, 0, 2)      # (B, S, H)
  if output_qks:
    k4 = outs[1].reshape(S, Bp, nh, dh)[:, :B].transpose(1, 2, 0, 3)
    v4 = outs[2].reshape(S, Bp, nh, dh)[:, :B].transpose(1, 2, 0, 3)
    qks = (k4, v4)
  else:
    qks = None
  return (ctx,), qks


def _reference(hs, pkv, ext_mask, params, num_heads):
  """Pure-JAX mirror of the PyTorch forward (dropout = eval/identity)."""
  B, S, H = hs.shape
  dh = H // num_heads
  gelu = lambda x: jax.nn.gelu(x, approximate=False)
  lin = lambda x, w, b: jnp.einsum("...i,oi->...o", x, w) + b
  t1 = gelu(jnp.einsum("bph,tp->bth", pkv, params["trs1_w"])
            + params["trs1_b"][None, :, None])
  t2 = gelu(jnp.einsum("bph,tp->bth", pkv, params["trs2_w"])
            + params["trs2_b"][None, :, None])
  heads = lambda x: x.reshape(B, S, num_heads, dh).transpose(0, 2, 1, 3)
  q = heads(lin(hs, params["q_w"], params["q_b"]))
  v = heads(lin(t1, params["v_w"], params["v_b"]))
  k = heads(lin(t2, params["k_w"], params["k_b"]))
  Bk = lin(q, params["wqk_w"], params["wqk_b"]) * lin(k, params["wk_w"], params["wk_b"])
  b = lin(Bk, params["wb_w"], params["wb_b"])                                          # (B,nh,S,1)
  m = jnp.swapaxes(lin(jnp.swapaxes(Bk, 3, 2), params["wm_w"], params["wm_b"]), 3, 2)  # (B,nh,1,dh)
  mask = jnp.transpose(ext_mask, (0, 1, 3, 2))                                         # (B,1,S,1)
  ao = jax.nn.softmax(b + mask, axis=-2) * v + jax.nn.softmax(m + mask, axis=-1) * v
  ctx = ao.transpose(0, 2, 1, 3).reshape(B, S, H)
  return ctx, k, v


if __name__ == "__main__":
  B, H, NH = 8, 32, 4
  DH = H // NH
  S, P = S_TEXT, P_VIS

  key = jax.random.PRNGKey(0)
  ks = jax.random.split(key, 20)
  nrm = lambda k, shape: (0.02 * jax.random.normal(k, shape, jnp.float32))
  params = {
      "q_w": nrm(ks[0], (H, H)), "q_b": nrm(ks[1], (H,)),
      "k_w": nrm(ks[2], (H, H)), "k_b": nrm(ks[3], (H,)),
      "v_w": nrm(ks[4], (H, H)), "v_b": nrm(ks[5], (H,)),
      "wqk_w": nrm(ks[6], (DH, DH)), "wqk_b": nrm(ks[7], (DH,)),
      "wk_w": nrm(ks[8], (DH, DH)), "wk_b": nrm(ks[9], (DH,)),
      "wb_w": nrm(ks[10], (1, DH)), "wb_b": nrm(ks[11], (1,)),
      "wm_w": nrm(ks[12], (1, S)), "wm_b": nrm(ks[13], (1,)),
      "trs1_w": nrm(ks[14], (S, P)), "trs1_b": nrm(ks[15], (S,)),
      "trs2_w": nrm(ks[16], (S, P)), "trs2_b": nrm(ks[17], (S,)),
  }

  hidden_states = jax.random.normal(ks[18], (B, S, H), jnp.float32)
  past_key_values = jax.random.normal(ks[19], (B, P, H), jnp.float32)

  # padding mask: batch 1 masks its last 6 tokens, batch 5 its last 17.
  keep = jnp.ones((B, S), jnp.float32).at[1, -6:].set(0.0).at[5, -17:].set(0.0)
  ext_mask = (1.0 - keep)[:, None, None, :] * -10000.0          # (B,1,1,S)

  max_lanes, min_steps = _tile_config()
  bt = _choose_batch_tile(B, H, max_lanes, min_steps)           # 8 on v6e, 4 on v5e/v7x
  prepared = prepare_mgmha_params(params, NH, bt, include_qks=True)

  (outs, qks) = mgmha_text_forward(hidden_states, past_key_values, ext_mask,
                                   prepared, output_qks=True)
  ctx = outs[0]
  jax.block_until_ready(ctx)

  ref_ctx, ref_k, ref_v = _reference(hidden_states, past_key_values, ext_mask, params, NH)
  assert ctx.shape == (B, S, H)
  assert qks[0].shape == (B, NH, S, DH) and qks[1].shape == (B, NH, S, DH)
  tol = dict(atol=3e-3, rtol=3e-3)
  assert jnp.allclose(ctx, ref_ctx, **tol), float(jnp.max(jnp.abs(ctx - ref_ctx)))
  assert jnp.allclose(qks[0], ref_k, **tol), float(jnp.max(jnp.abs(qks[0] - ref_k)))
  assert jnp.allclose(qks[1], ref_v, **tol), float(jnp.max(jnp.abs(qks[1] - ref_v)))
  print("KERNEL_OK")
</pallas_src>

<mosaic_0001>
module attributes {stable_mosaic.version = 11 : i64} {
  func.func @_mgmha_kernel(%arg0: i32, %arg1: memref<40x128xbf16, #tpu.memory_space<vmem>>, %arg2: memref<49x128xbf16, #tpu.memory_space<vmem>>, %arg3: memref<40x128xbf16, #tpu.memory_space<vmem>>, %arg4: memref<768x128xbf16, #tpu.memory_space<vmem>>, %arg5: memref<6x128xbf16, #tpu.memory_space<vmem>>, %arg6: memref<80x49xbf16, #tpu.memory_space<vmem>>, %arg7: memref<120x128xbf16, #tpu.memory_space<vmem>>, %arg8: memref<40x128xf32, #tpu.memory_space<vmem>>, %arg9: memref<40x128xf32, #tpu.memory_space<vmem>>, %arg10: memref<40x128xf32, #tpu.memory_space<vmem>>) attributes {dimension_semantics = [#tpu.dimension_semantics<parallel>], iteration_bounds = array<i64: 2>, scalar_prefetch = 0 : i64, scratch_operands = 0 : i64, tpu.core_type = #tpu.core_type<tc>, window_params = [{transform_indices = @transform_0, window_bounds = array<i64: 40, 128>}, {transform_indices = @transform_1, window_bounds = array<i64: 49, 128>}, {transform_indices = @transform_2, window_bounds = array<i64: 40, 128>}, {pipeline_mode = #tpu.pipeline_mode<synchronous>, transform_indices = @transform_3, window_bounds = array<i64: 768, 128>}, {pipeline_mode = #tpu.pipeline_mode<synchronous>, transform_indices = @transform_4, window_bounds = array<i64: 6, 128>}, {pipeline_mode = #tpu.pipeline_mode<synchronous>, transform_indices = @transform_5, window_bounds = array<i64: 80, 49>}, {pipeline_mode = #tpu.pipeline_mode<synchronous>, transform_indices = @transform_6, window_bounds = array<i64: 120, 128>}, {transform_indices = @transform_7, window_bounds = array<i64: 40, 128>}, {transform_indices = @transform_8, window_bounds = array<i64: 40, 128>}, {transform_indices = @transform_9, window_bounds = array<i64: 40, 128>}]} {
    %c0 = arith.constant 0 : index
    %c0_0 = arith.constant 0 : index
    %0 = vector.load %arg6[%c0, %c0_0] : memref<80x49xbf16, #tpu.memory_space<vmem>>, vector<80x49xbf16>
    %c0_1 = arith.constant 0 : index
    %c0_2 = arith.constant 0 : index
    %1 = vector.load %arg2[%c0_1, %c0_2] : memref<49x128xbf16, #tpu.memory_space<vmem>>, vector<49x128xbf16>
    %cst = arith.constant dense<0.000000e+00> : vector<80x128xf32>
    %2 = tpu.matmul %0, %1, %cst {dimension_numbers = #tpu.dot_dimension_numbers<[1], [0], [0], [1], [0, 0, 1, 1], [], []>} : vector<80x49xbf16>, vector<49x128xbf16>, vector<80x128xf32> -> vector<80x128xf32>
    %c0_3 = arith.constant 0 : index
    %c0_4 = arith.constant 0 : index
    %3 = vector.load %arg7[%c0_3, %c0_4] : memref<120x128xbf16, #tpu.memory_space<vmem>>, vector<80x128xbf16>
    %4 = arith.extf %3 : vector<80x128xbf16> to vector<80x128xf32>
    %5 = arith.addf %2, %4 : vector<80x128xf32>
    %6 = arith.mulf %5, %5 : vector<80x128xf32>
    %7 = arith.mulf %5, %6 : vector<80x128xf32>
    %cst_5 = arith.constant 4.471500e-02 : f32
    %8 = vector.broadcast %cst_5 : f32 to vector<80x128xf32>
    %9 = arith.mulf %8, %7 : vector<80x128xf32>
    %10 = arith.addf %5, %9 : vector<80x128xf32>
    %cst_6 = arith.constant 0.797884583 : f32
    %11 = vector.broadcast %cst_6 : f32 to vector<80x128xf32>
    %12 = arith.mulf %11, %10 : vector<80x128xf32>
    %13 = math.tanh %12 : vector<80x128xf32>
    %cst_7 = arith.constant 1.000000e+00 : f32
    %14 = vector.broadcast %cst_7 : f32 to vector<80x128xf32>
    %15 = arith.addf %14, %13 : vector<80x128xf32>
    %cst_8 = arith.constant 5.000000e-01 : f32
    %16 = vector.broadcast %cst_8 : f32 to vector<80x128xf32>
    %17 = arith.mulf %16, %15 : vector<80x128xf32>
    %18 = arith.mulf %5, %17 : vector<80x128xf32>
    %19 = vector.extract_strided_slice %18 {offsets = [0, 0], sizes = [40, 128], strides = [1, 1]} : vector<80x128xf32> to vector<40x128xf32>
    %20 = arith.truncf %19 : vector<40x128xf32> to vector<40x128xbf16>
    %21 = vector.extract_strided_slice %18 {offsets = [40, 0], sizes = [40, 128], strides = [1, 1]} : vector<80x128xf32> to vector<40x128xf32>
    %22 = arith.truncf %21 : vector<40x128xf32> to vector<40x128xbf16>
    %c256 = arith.constant 256 : index
    %c0_9 = arith.constant 0 : index
    %23 = vector.load %arg4[%c256, %c0_9] : memref<768x128xbf16, #tpu.memory_space<vmem>>, vector<128x128xbf16>
    %cst_10 = arith.constant dense<0.000000e+00> : vector<40x128xf32>
    %24 = tpu.matmul %20, %23, %cst_10 {dimension_numbers = #tpu.dot_dimension_numbers<[1], [0], [0], [1], [0, 0, 1, 1], [], []>} : vector<40x128xbf16>, vector<128x128xbf16>, vector<40x128xf32> -> vector<40x128xf32>
    %c2 = arith.constant 2 : index
    %c0_11 = arith.constant 0 : index
    %25 = vector.load %arg5[%c2, %c0_11] : memref<6x128xbf16, #tpu.memory_space<vmem>>, vector<1x128xbf16>
    %26 = arith.extf %25 : vector<1x128xbf16> to vector<1x128xf32>
    %27 = vector.broadcast %26 : vector<1x128xf32> to vector<40x128xf32>
    %28 = arith.addf %24, %27 : vector<40x128xf32>
    %c640 = arith.constant 640 : index
    %c0_12 = arith.constant 0 : index
    %29 = vector.load %arg4[%c640, %c0_12] : memref<768x128xbf16, #tpu.memory_space<vmem>>, vector<128x128xbf16>
    %cst_13 = arith.constant dense<0.000000e+00> : vector<40x128xf32>
    %30 = tpu.matmul %22, %29, %cst_13 {dimension_numbers = #tpu.dot_dimension_numbers<[1], [0], [0], [1], [0, 0, 1, 1], [], []>} : vector<40x128xbf16>, vector<128x128xbf16>, vector<40x128xf32> -> vector<40x128xf32>
    %c5 = arith.constant 5 : index
    %c0_14 = arith.constant 0 : index
    %31 = vector.load %arg5[%c5, %c0_14] : memref<6x128xbf16, #tpu.memory_space<vmem>>, vector<1x128xbf16>
    %32 = arith.extf %31 : vector<1x128xbf16> to vector<1x128xf32>
    %33 = vector.broadcast %32 : vector<1x128xf32> to vector<40x128xf32>
    %34 = arith.addf %30, %33 : vector<40x128xf32>
    %c0_15 = arith.constant 0 : index
    %c0_16 = arith.constant 0 : index
    %35 = vector.load %arg9[%c0_15, %c0_16] : memref<40x128xf32, #tpu.memory_space<vmem>>, vector<40x128xf32>
    tpu.vector_store %arg9[%c0_15, %c0_16], %34 {strides = array<i32>} : memref<40x128xf32, #tpu.memory_space<vmem>>, vector<40x128xf32>,
    %c0_17 = arith.constant 0 : index
    %c0_18 = arith.constant 0 : index
    %36 = vector.load %arg10[%c0_17, %c0_18] : memref<40x128xf32, #tpu.memory_space<vmem>>, vector<40x128xf32>
    tpu.vector_store %arg10[%c0_17, %c0_18], %28 {strides = array<i32>} : memref<40x128xf32, #tpu.memory_space<vmem>>, vector<40x128xf32>,
    %c128 = arith.constant 128 : index
    %c0_19 = arith.constant 0 : index
    %37 = vector.load %arg4[%c128, %c0_19] : memref<768x128xbf16, #tpu.memory_space<vmem>>, vector<128x128xbf16>
    %cst_20 = arith.constant dense<0.000000e+00> : vector<40x128xf32>
    %38 = tpu.matmul %22, %37, %cst_20 {dimension_numbers = #tpu.dot_dimension_numbers<[1], [0], [0], [1], [0, 0, 1, 1], [], []>} : vector<40x128xbf16>, vector<128x128xbf16>, vector<40x128xf32> -> vector<40x128xf32>
    %c1 = arith.constant 1 : index
    %c0_21 = arith.constant 0 : index
    %39 = vector.load %arg5[%c1, %c0_21] : memref<6x128xbf16, #tpu.memory_space<vmem>>, vector<1x128xbf16>
    %40 = arith.extf %39 : vector<1x128xbf16> to vector<1x128xf32>
    %41 = vector.broadcast %40 : vector<1x128xf32> to vector<40x128xf32>
    %42 = arith.addf %38, %41 : vector<40x128xf32>
    %c0_22 = arith.constant 0 : index
    %c0_23 = arith.constant 0 : index
    %43 = vector.load %arg4[%c0_22, %c0_23] : memref<768x128xbf16, #tpu.memory_space<vmem>>, vector<128x128xbf16>
    %c0_24 = arith.constant 0 : index
    %c0_25 = arith.constant 0 : index
    %44 = vector.load %arg1[%c0_24, %c0_25] : memref<40x128xbf16, #tpu.memory_space<vmem>>, vector<40x128xbf16>
    %cst_26 = arith.constant dense<0.000000e+00> : vector<40x128xf32>
    %45 = tpu.matmul %44, %43, %cst_26 {dimension_numbers = #tpu.dot_dimension_numbers<[1], [0], [0], [1], [0, 0, 1, 1], [], []>} : vector<40x128xbf16>, vector<128x128xbf16>, vector<40x128xf32> -> vector<40x128xf32>
    %c0_27 = arith.constant 0 : index
    %c0_28 = arith.constant 0 : index
    %46 = vector.load %arg5[%c0_27, %c0_28] : memref<6x128xbf16, #tpu.memory_space<vmem>>, vector<1x128xbf16>
    %47 = arith.extf %46 : vector<1x128xbf16> to vector<1x128xf32>
    %48 = vector.broadcast %47 : vector<1x128xf32> to vector<40x128xf32>
    %49 = arith.addf %45, %48 : vector<40x128xf32>
    %50 = arith.mulf %49, %42 : vector<40x128xf32>
    %c384 = arith.constant 384 : index
    %c0_29 = arith.constant 0 : index
    %51 = vector.load %arg4[%c384, %c0_29] : memref<768x128xbf16, #tpu.memory_space<vmem>>, vector<128x128xbf16>
    %52 = arith.truncf %50 : vector<40x128xf32> to vector<40x128xbf16>
    %cst_30 = arith.constant dense<0.000000e+00> : vector<40x128xf32>
    %53 = tpu.matmul %52, %51, %cst_30 {dimension_numbers = #tpu.dot_dimension_numbers<[1], [0], [0], [1], [0, 0, 1, 1], [], []>} : vector<40x128xbf16>, vector<128x128xbf16>, vector<40x128xf32> -> vector<40x128xf32>
    %c3 = arith.constant 3 : index
    %c0_31 = arith.constant 0 : index
    %54 = vector.load %arg5[%c3, %c0_31] : memref<6x128xbf16, #tpu.memory_space<vmem>>, vector<1x128xbf16>
    %55 = arith.extf %54 : vector<1x128xbf16> to vector<1x128xf32>
    %56 = vector.broadcast %55 : vector<1x128xf32> to vector<40x128xf32>
    %57 = arith.addf %53, %56 : vector<40x128xf32>
    %c0_32 = arith.constant 0 : index
    %c0_33 = arith.constant 0 : index
    %58 = vector.load %arg3[%c0_32, %c0_33] : memref<40x128xbf16, #tpu.memory_space<vmem>>, vector<40x128xbf16>
    %59 = arith.extf %58 : vector<40x128xbf16> to vector<40x128xf32>
    %60 = arith.addf %57, %59 : vector<40x128xf32>
    %cst_34 = arith.constant dense<0xFF800000> : vector<128xf32>
    %61 = vector.multi_reduction <maximumf>, %60, %cst_34 [0] : vector<40x128xf32> to vector<128xf32>
    %62 = vector.shape_cast %61 : vector<128xf32> to vector<1x128xf32>
    %63 = vector.broadcast %62 : vector<1x128xf32> to vector<40x128xf32>
    %64 = arith.subf %60, %63 : vector<40x128xf32>
    %65 = math.exp %64 : vector<40x128xf32>
    %cst_35 = arith.constant dense<0.000000e+00> : vector<128xf32>
    %66 = vector.multi_reduction <add>, %65, %cst_35 [0] : vector<40x128xf32> to vector<128xf32>
    %67 = vector.shape_cast %66 : vector<128xf32> to vector<1x128xf32>
    %68 = tpu.reciprocal %67 {approx = true} : vector<1x128xf32> -> vector<1x128xf32>
    %69 = vector.broadcast %68 : vector<1x128xf32> to vector<40x128xf32>
    %70 = arith.mulf %65, %69 : vector<40x128xf32>
    %c80 = arith.constant 80 : index
    %c0_36 = arith.constant 0 : index
    %71 = vector.load %arg7[%c80, %c0_36] : memref<120x128xbf16, #tpu.memory_space<vmem>>, vector<40x128xbf16>
    %72 = arith.extf %71 : vector<40x128xbf16> to vector<40x128xf32>
    %73 = arith.mulf %72, %50 : vector<40x128xf32>
    %cst_37 = arith.constant dense<0.000000e+00> : vector<128xf32>
    %74 = vector.multi_reduction <add>, %73, %cst_37 [0] : vector<40x128xf32> to vector<128xf32>
    %75 = vector.shape_cast %74 : vector<128xf32> to vector<1x128xf32>
    %c4 = arith.constant 4 : index
    %c0_38 = arith.constant 0 : index
    %76 = vector.load %arg5[%c4, %c0_38] : memref<6x128xbf16, #tpu.memory_space<vmem>>, vector<1x128xbf16>
    %77 = arith.extf %76 : vector<1x128xbf16> to vector<1x128xf32>
    %78 = arith.addf %75, %77 : vector<1x128xf32>
    %cst_39 = arith.constant dense<0xFF800000> : vector<1xf32>
    %79 = vector.multi_reduction <maximumf>, %78, %cst_39 [1] : vector<1x128xf32> to vector<1xf32>
    %80 = vector.shape_cast %79 : vector<1xf32> to vector<1x1xf32>
    %81 = vector.broadcast %80 : vector<1x1xf32> to vector<1x128xf32>
    %82 = arith.subf %78, %81 : vector<1x128xf32>
    %83 = math.exp %82 : vector<1x128xf32>
    %c512 = arith.constant 512 : index
    %c0_40 = arith.constant 0 : index
    %84 = vector.load %arg4[%c512, %c0_40] : memref<768x128xbf16, #tpu.memory_space<vmem>>, vector<128x128xbf16>
    %85 = arith.truncf %83 : vector<1x128xf32> to vector<1x128xbf16>
    %cst_41 = arith.constant dense<0.000000e+00> : vector<1x128xf32>
    %86 = tpu.matmul %85, %84, %cst_41 {dimension_numbers = #tpu.dot_dimension_numbers<[1], [0], [0], [1], [0, 0, 1, 1], [], []>} : vector<1x128xbf16>, vector<128x128xbf16>, vector<1x128xf32> -> vector<1x128xf32>
    %87 = tpu.reciprocal %86 {approx = true} : vector<1x128xf32> -> vector<1x128xf32>
    %88 = arith.mulf %83, %87 : vector<1x128xf32>
    %89 = vector.broadcast %88 : vector<1x128xf32> to vector<40x128xf32>
    %90 = arith.addf %70, %89 : vector<40x128xf32>
    %91 = arith.mulf %90, %28 : vector<40x128xf32>
    %c0_42 = arith.constant 0 : index
    %c0_43 = arith.constant 0 : index
    %92 = vector.load %arg8[%c0_42, %c0_43] : memref<40x128xf32, #tpu.memory_space<vmem>>, vector<40x128xf32>
    tpu.vector_store %arg8[%c0_42, %c0_43], %91 {strides = array<i32>} : memref<40x128xf32, #tpu.memory_space<vmem>>, vector<40x128xf32>,
    return
  }
  func.func @transform_0(%arg0: i32) -> (i32, i32) {
    %c0_i32 = arith.constant 0 : i32
    %c0_i32_0 = arith.constant 0 : i32
    return %c0_i32, %arg0 : i32, i32
  }
  func.func @transform_1(%arg0: i32) -> (i32, i32) {
    %c0_i32 = arith.constant 0 : i32
    %c0_i32_0 = arith.constant 0 : i32
    return %c0_i32, %arg0 : i32, i32
  }
  func.func @transform_2(%arg0: i32) -> (i32, i32) {
    %c0_i32 = arith.constant 0 : i32
    %c0_i32_0 = arith.constant 0 : i32
    return %c0_i32, %arg0 : i32, i32
  }
  func.func @transform_3(%arg0: i32) -> (i32, i32) {
    %c0_i32 = arith.constant 0 : i32
    %c0_i32_0 = arith.constant 0 : i32
    %c0_i32_1 = arith.constant 0 : i32
    return %c0_i32, %c0_i32_0 : i32, i32
  }
  func.func @transform_4(%arg0: i32) -> (i32, i32) {
    %c0_i32 = arith.constant 0 : i32
    %c0_i32_0 = arith.constant 0 : i32
    %c0_i32_1 = arith.constant 0 : i32
    return %c0_i32, %c0_i32_0 : i32, i32
  }
  func.func @transform_5(%arg0: i32) -> (i32, i32) {
    %c0_i32 = arith.constant 0 : i32
    %c0_i32_0 = arith.constant 0 : i32
    %c0_i32_1 = arith.constant 0 : i32
    return %c0_i32, %c0_i32_0 : i32, i32
  }
  func.func @transform_6(%arg0: i32) -> (i32, i32) {
    %c0_i32 = arith.constant 0 : i32
    %c0_i32_0 = arith.constant 0 : i32
    %c0_i32_1 = arith.constant 0 : i32
    return %c0_i32, %c0_i32_0 : i32, i32
  }
  func.func @transform_7(%arg0: i32) -> (i32, i32) {
    %c0_i32 = arith.constant 0 : i32
    %c0_i32_0 = arith.constant 0 : i32
    return %c0_i32, %arg0 : i32, i32
  }
  func.func @transform_8(%arg0: i32) -> (i32, i32) {
    %c0_i32 = arith.constant 0 : i32
    %c0_i32_0 = arith.constant 0 : i32
    return %c0_i32, %arg0 : i32, i32
  }
  func.func @transform_9(%arg0: i32) -> (i32, i32) {
    %c0_i32 = arith.constant 0 : i32
    %c0_i32_0 = arith.constant 0 : i32
    return %c0_i32, %arg0 : i32, i32
  }
}

</mosaic_0001>

<llo_original>
// kernel: tpu_custom_call.1
$region0: #{tpu_custom_call.1}
  #allocation0 [shape = 'u32[]', space=smem, size = 0x4, offset = 0x4, fixed_abs, tag = 'smem constant byte address 0x4 - core index']
  #allocation1 [shape = 'u32[144,128]{1,0:T(1,128)}', space=vmem, size = 0x12000, scoped, tag = 'internal scratch']
  %s0 = inlined_call_operand.hbm [shape: bf16[40,256], index: 0, kind: input, shape index: {}]
  %s1 = inlined_call_operand.hbm [shape: bf16[49,256], index: 1, kind: input, shape index: {}]
  %s2 = inlined_call_operand.hbm [shape: bf16[40,256], index: 2, kind: input, shape index: {}]
  %s3 = inlined_call_operand.hbm [shape: bf16[768,128], index: 3, kind: input, shape index: {}]
  %s4 = inlined_call_operand.vmem [shape: bf16[6,128], index: 4, kind: input, shape index: {}]
  %s5 = inlined_call_operand.vmem [shape: bf16[80,49], index: 5, kind: input, shape index: {}]
  %s6 = inlined_call_operand.vmem [shape: bf16[120,128], index: 6, kind: input, shape index: {}]
  %s7 = inlined_call_operand.hbm [shape: f32[40,256], index: 7, kind: output, shape index: {0}]
  %s8 = inlined_call_operand.hbm [shape: f32[40,256], index: 8, kind: output, shape index: {1}]
  %s9 = inlined_call_operand.hbm [shape: f32[40,256], index: 9, kind: output, shape index: {2}]
  %10 = xla_tuple %s7, %s8, %s9
  %s11 = sld [smem:[#allocation0]]
  $region93: #{tpu_custom_call.1} parent=0
    _
  %s13 = ssub.s32 1, %s11
  %s14 = scalar_select 0, %s13, %s11
  $region1: #{tpu_custom_call.1} parent=0
    #allocation2 [shape = 'u8[20480]{0}', space=vmem, size = 0x5000, scoped, tag = 'input window, operand 0']
    #allocation3 [shape = 's32[2]{0}', space=sflag, size = 0x8, scoped, tag = 'scoped memory for tpu_custom_call.1']
    #allocation4 [shape = 's32[2]{0}', space=sflag, size = 0x8, scoped, tag = 'scoped memory for tpu_custom_call.1']
    #allocation5 [shape = 'u8[28672]{0}', space=vmem, size = 0x7000, scoped, tag = 'input window, operand 1']
    #allocation6 [shape = 's32[2]{0}', space=sflag, size = 0x8, scoped, tag = 'scoped memory for tpu_custom_call.1']
    #allocation7 [shape = 'u8[20480]{0}', space=vmem, size = 0x5000, scoped, tag = 'input window, operand 2']
    #allocation8 [shape = 'u8[196608]{0}', space=vmem, size = 0x30000, scoped, tag = 'input window, operand 3, single buffered']
    #allocation9 [shape = 's32[1]{0}', space=sflag, size = 0x4, scoped, tag = 'scoped memory for tpu_custom_call.1']
    #allocation10 [shape = 'u8[40960]{0}', space=vmem, size = 0xa000, scoped, tag = 'output window, operand 0']
    #allocation11 [shape = 'u8[40960]{0}', space=vmem, size = 0xa000, scoped, tag = 'output window, operand 1']
    #allocation12 [shape = 's32[2]{0}', space=sflag, size = 0x8, scoped, tag = 'scoped memory for tpu_custom_call.1']
    #allocation13 [shape = 'u8[40960]{0}', space=vmem, size = 0xa000, scoped, tag = 'output window, operand 2']
    %15 = vsyncpa [#allocation3], 0
    %s16 = scalar_lea.sflag [#allocation3], 1
    %17 = vsyncpa %s16, 0
    %18 = vsyncpa [#allocation6], 0
    %s19 = scalar_lea.sflag [#allocation6], 1
    %20 = vsyncpa %s19, 0
    %21 = vsyncpa [#allocation9], 0
    %22 = vsyncpa [#allocation4], 0
    %s23 = scalar_lea.sflag [#allocation4], 1
    %24 = vsyncpa %s23, 0
    %25 = vsyncpa [#allocation12], 0
    %s26 = scalar_lea.sflag [#allocation12], 1
    %27 = vsyncpa %s26, 0
    loop: start=0, step=1, limit=4
    $region2: #{tpu_custom_call.1} parent=1 // loop_pre_header
      _
    $region3: #{tpu_custom_call.1} parent=1 // loop_header
      %s29 = sphi 0, %s33
      %p30 = scmp.ge.s32.totalorder %s29, 4
      %s39 = sphi 0, %s41
      %s42 = sphi 0, %s39
      %s43 = sphi 0, %s42
      %s59 = sphi 0, %s43
      %s65 = sphi 0, %s67
      %s68 = sphi 0, %s65
      %s69 = sphi 0, %s68
      %s85 = sphi 0, %s69
      %s91 = sphi 0, %s93
      %s94 = sphi 0, %s91
      %s95 = sphi 0, %s94
      %s111 = sphi 0, %s95
      %s115 = sphi 0, %s115
      %s117 = sphi 0, %s115
      %s118 = sphi 0, %s117
      %s132 = sphi 0, %s118
      %s136 = sphi 0, %s136
      %s138 = sphi 0, %s136
      %s139 = sphi 0, %s138
      %s153 = sphi 0, %s139
      %s157 = sphi 0, %s157
      %s159 = sphi 0, %s157
      %s160 = sphi 0, %s159
      %s174 = sphi 0, %s160
      %s178 = sphi 0, %s178
      %s180 = sphi 0, %s178
      %s181 = sphi 0, %s180
      %s195 = sphi 0, %s181
      %s201 = sphi 0, %s203
      %s204 = sphi 0, %s201
      %s205 = sphi 0, %s204
      %s221 = sphi 0, %s205
      %s227 = sphi 0, %s229
      %s230 = sphi 0, %s227
      %s231 = sphi 0, %s230
      %s247 = sphi 0, %s231
      %s253 = sphi 0, %s255
      %s256 = sphi 0, %s253
      %s257 = sphi 0, %s256
      %s273 = sphi 0, %s257
    $region4: #{tpu_custom_call.1} parent=1 // loop_header_branch
      %32 = sbr.rel (%p30) target = $region8
    $region5: #{tpu_custom_call.1} parent=1 // loop_body
      %s34 = ssub.s32 %s29, 1
      %s35 = ssub.s32 %s29, 2
      %s36 = sadd.s32 %s29, 1
      %s37 = ssub.s32 %s29, %s36
      %p38 = scmp.eq.s32.totalorder %s37, 0
      %s40 = sadd.s32 %s39, 1
      %s41 = scalar_select %p38, %s39, %s40
      %p44 = pneg %p38
      %p45 = scmp.eq.s32.totalorder %s29, 1
      %p46 = por %p44, %p45
      %p47 = scmp.ne.s32.totalorder %s39, %s42
      %p48 = scmp.eq.s32.totalorder %s29, 0
      %p49 = por %p47, %p48
      %p50 = scmp.ne.s32.totalorder %s39, %s42
      %p51 = scmp.eq.s32.totalorder %s34, 1
      %p52 = por %p50, %p51
      %p53 = scmp.ne.s32.totalorder %s42, %s43
      %p54 = scmp.eq.s32.totalorder %s34, 0
      %p55 = por %p53, %p54
      %p56 = scmp.ne.s32.totalorder %s42, %s43
      %p57 = scmp.eq.s32.totalorder %s35, 1
      %p58 = por %p56, %p57
      %p60 = scmp.ne.s32.totalorder %s43, %s59
      %p61 = scmp.eq.s32.totalorder %s35, 0
      %p62 = por %p60, %p61
      %s63 = ssub.s32 %s29, %s36
      %p64 = scmp.eq.s32.totalorder %s63, 0
      %s66 = sadd.s32 %s65, 1
      %s67 = scalar_select %p64, %s65, %s66
      %p70 = pneg %p64
      %p71 = scmp.eq.s32.totalorder %s29, 1
      %p72 = por %p70, %p71
      %p73 = scmp.ne.s32.totalorder %s65, %s68
      %p74 = scmp.eq.s32.totalorder %s29, 0
      %p75 = por %p73, %p74
      %p76 = scmp.ne.s32.totalorder %s65, %s68
      %p77 = scmp.eq.s32.totalorder %s34, 1
      %p78 = por %p76, %p77
      %p79 = scmp.ne.s32.totalorder %s68, %s69
      %p80 = scmp.eq.s32.totalorder %s34, 0
      %p81 = por %p79, %p80
      %p82 = scmp.ne.s32.totalorder %s68, %s69
      %p83 = scmp.eq.s32.totalorder %s35, 1
      %p84 = por %p82, %p83
      %p86 = scmp.ne.s32.totalorder %s69, %s85
      %p87 = scmp.eq.s32.totalorder %s35, 0
      %p88 = por %p86, %p87
      %s89 = ssub.s32 %s29, %s36
      %p90 = scmp.eq.s32.totalorder %s89, 0
      %s92 = sadd.s32 %s91, 1
      %s93 = scalar_select %p90, %s91, %s92
      %p96 = pneg %p90
      %p97 = scmp.eq.s32.totalorder %s29, 1
      %p98 = por %p96, %p97
      %p99 = scmp.ne.s32.totalorder %s91, %s94
      %p100 = scmp.eq.s32.totalorder %s29, 0
      %p101 = por %p99, %p100
      %p102 = scmp.ne.s32.totalorder %s91, %s94
      %p103 = scmp.eq.s32.totalorder %s34, 1
      %p104 = por %p102, %p103
      %p105 = scmp.ne.s32.totalorder %s94, %s95
      %p106 = scmp.eq.s32.totalorder %s34, 0
      %p107 = por %p105, %p106
      %p108 = scmp.ne.s32.totalorder %s94, %s95
      %p109 = scmp.eq.s32.totalorder %s35, 1
      %p110 = por %p108, %p109
      %p112 = scmp.ne.s32.totalorder %s95, %s111
      %p113 = scmp.eq.s32.totalorder %s35, 0
      %p114 = por %p112, %p113
      %s116 = sadd.s32 %s115, 1
      %p119 = scmp.eq.s32.totalorder %s29, 1
      %p120 = scmp.ne.s32.totalorder %s115, %s117
      %p121 = scmp.eq.s32.totalorder %s29, 0
      %p122 = por %p120, %p121
      %p123 = scmp.ne.s32.totalorder %s115, %s117
      %p124 = scmp.eq.s32.totalorder %s34, 1
      %p125 = por %p123, %p124
      %p126 = scmp.ne.s32.totalorder %s117, %s118
      %p127 = scmp.eq.s32.totalorder %s34, 0
      %p128 = por %p126, %p127
      %p129 = scmp.ne.s32.totalorder %s117, %s118
      %p130 = scmp.eq.s32.totalorder %s35, 1
      %p131 = por %p129, %p130
      %p133 = scmp.ne.s32.totalorder %s118, %s132
      %p134 = scmp.eq.s32.totalorder %s35, 0
      %p135 = por %p133, %p134
      %s137 = sadd.s32 %s136, 1
      %p140 = scmp.eq.s32.totalorder %s29, 1
      %p141 = scmp.ne.s32.totalorder %s136, %s138
      %p142 = scmp.eq.s32.totalorder %s29, 0
      %p143 = por %p141, %p142
      %p144 = scmp.ne.s32.totalorder %s136, %s138
      %p145 = scmp.eq.s32.totalorder %s34, 1
      %p146 = por %p144, %p145
      %p147 = scmp.ne.s32.totalorder %s138, %s139
      %p148 = scmp.eq.s32.totalorder %s34, 0
      %p149 = por %p147, %p148
      %p150 = scmp.ne.s32.totalorder %s138, %s139
      %p151 = scmp.eq.s32.totalorder %s35, 1
      %p152 = por %p150, %p151
      %p154 = scmp.ne.s32.totalorder %s139, %s153
      %p155 = scmp.eq.s32.totalorder %s35, 0
      %p156 = por %p154, %p155
      %s158 = sadd.s32 %s157, 1
      %p161 = scmp.eq.s32.totalorder %s29, 1
      %p162 = scmp.ne.s32.totalorder %s157, %s159
      %p163 = scmp.eq.s32.totalorder %s29, 0
      %p164 = por %p162, %p163
      %p165 = scmp.ne.s32.totalorder %s157, %s159
      %p166 = scmp.eq.s32.totalorder %s34, 1
      %p167 = por %p165, %p166
      %p168 = scmp.ne.s32.totalorder %s159, %s160
      %p169 = scmp.eq.s32.totalorder %s34, 0
      %p170 = por %p168, %p169
      %p171 = scmp.ne.s32.totalorder %s159, %s160
      %p172 = scmp.eq.s32.totalorder %s35, 1
      %p173 = por %p171, %p172
      %p175 = scmp.ne.s32.totalorder %s160, %s174
      %p176 = scmp.eq.s32.totalorder %s35, 0
      %p177 = por %p175, %p176
      %s179 = sadd.s32 %s178, 1
      %p182 = scmp.eq.s32.totalorder %s29, 1
      %p183 = scmp.ne.s32.totalorder %s178, %s180
      %p184 = scmp.eq.s32.totalorder %s29, 0
      %p185 = por %p183, %p184
      %p186 = scmp.ne.s32.totalorder %s178, %s180
      %p187 = scmp.eq.s32.totalorder %s34, 1
      %p188 = por %p186, %p187
      %p189 = scmp.ne.s32.totalorder %s180, %s181
      %p190 = scmp.eq.s32.totalorder %s34, 0
      %p191 = por %p189, %p190
      %p192 = scmp.ne.s32.totalorder %s180, %s181
      %p193 = scmp.eq.s32.totalorder %s35, 1
      %p194 = por %p192, %p193
      %p196 = scmp.ne.s32.totalorder %s181, %s195
      %p197 = scmp.eq.s32.totalorder %s35, 0
      %p198 = por %p196, %p197
      %s199 = ssub.s32 %s29, %s36
      %p200 = scmp.eq.s32.totalorder %s199, 0
      %s202 = sadd.s32 %s201, 1
      %s203 = scalar_select %p200, %s201, %s202
      %p206 = pneg %p200
      %p207 = scmp.eq.s32.totalorder %s29, 1
      %p208 = por %p206, %p207
      %p209 = scmp.ne.s32.totalorder %s201, %s204
      %p210 = scmp.eq.s32.totalorder %s29, 0
      %p211 = por %p209, %p210
      %p212 = scmp.ne.s32.totalorder %s201, %s204
      %p213 = scmp.eq.s32.totalorder %s34, 1
      %p214 = por %p212, %p213
      %p215 = scmp.ne.s32.totalorder %s204, %s205
      %p216 = scmp.eq.s32.totalorder %s34, 0
      %p217 = por %p215, %p216
      %p218 = scmp.ne.s32.totalorder %s204, %s205
      %p219 = scmp.eq.s32.totalorder %s35, 1
      %p220 = por %p218, %p219
      %p222 = scmp.ne.s32.totalorder %s205, %s221
      %p223 = scmp.eq.s32.totalorder %s35, 0
      %p224 = por %p222, %p223
      %s225 = ssub.s32 %s29, %s36
      %p226 = scmp.eq.s32.totalorder %s225, 0
      %s228 = sadd.s32 %s227, 1
      %s229 = scalar_select %p226, %s227, %s228
      %p232 = pneg %p226
      %p233 = scmp.eq.s32.totalorder %s29, 1
      %p234 = por %p232, %p233
      %p235 = scmp.ne.s32.totalorder %s227, %s230
      %p236 = scmp.eq.s32.totalorder %s29, 0
      %p237 = por %p235, %p236
      %p238 = scmp.ne.s32.totalorder %s227, %s230
      %p239 = scmp.eq.s32.totalorder %s34, 1
      %p240 = por %p238, %p239
      %p241 = scmp.ne.s32.totalorder %s230, %s231
      %p242 = scmp.eq.s32.totalorder %s34, 0
      %p243 = por %p241, %p242
      %p244 = scmp.ne.s32.totalorder %s230, %s231
      %p245 = scmp.eq.s32.totalorder %s35, 1
      %p246 = por %p244, %p245
      %p248 = scmp.ne.s32.totalorder %s231, %s247
      %p249 = scmp.eq.s32.totalorder %s35, 0
      %p250 = por %p248, %p249
      %s251 = ssub.s32 %s29, %s36
      %p252 = scmp.eq.s32.totalorder %s251, 0
      %s254 = sadd.s32 %s253, 1
      %s255 = scalar_select %p252, %s253, %s254
      %p258 = pneg %p252
      %p259 = scmp.eq.s32.totalorder %s29, 1
      %p260 = por %p258, %p259
      %p261 = scmp.ne.s32.totalorder %s253, %s256
      %p262 = scmp.eq.s32.totalorder %s29, 0
      %p263 = por %p261, %p262
      %p264 = scmp.ne.s32.totalorder %s253, %s256
      %p265 = scmp.eq.s32.totalorder %s34, 1
      %p266 = por %p264, %p265
      %p267 = scmp.ne.s32.totalorder %s256, %s257
      %p268 = scmp.eq.s32.totalorder %s34, 0
      %p269 = por %p267, %p268
      %p270 = scmp.ne.s32.totalorder %s256, %s257
      %p271 = scmp.eq.s32.totalorder %s35, 1
      %p272 = por %p270, %p271
      %p274 = scmp.ne.s32.totalorder %s257, %s273
      %p275 = scmp.eq.s32.totalorder %s35, 0
      %p276 = por %p274, %p275
      %p277 = scmp.le.s32.totalorder 1, %s29
      %p278 = scmp.lt.s32.totalorder %s29, 3
      %p279 = pnand %p277, %p278
      %p280 = pneg %p279
      // Predicated region
      $region9: #{tpu_custom_call.1} parent=5 // pred_check
        _
      $region10: #{tpu_custom_call.1} parent=5 // pred_check_branch
        %282 = sbr.rel (%p279) target = $region12
      $region11: #{tpu_custom_call.1} parent=5 // pred_region
        %s283 = ssub.s32 %s29, 1
        // Predicated region
        $region13: #{tpu_custom_call.1} parent=11 // pred_check
          %p284 = pneg %p128
        $region14: #{tpu_custom_call.1} parent=11 // pred_check_branch
          %286 = sbr.rel (%p284) target = $region16
        $region15: #{tpu_custom_call.1} parent=11 // pred_region
          %s288 = ssub.s32 6144, 6144
          %289 = vsyncadd [#allocation9], %s288
          %s290 = sshll.u32 [#allocation8], 4
          %s291 = int_to_ptr.vmem [resolvable:$true] %s290
          %296 = dma.hbm_to_vmem [thread:$0]  %s3, 6144, %s291, [#allocation9], 64, 64, 4
        $region16: #{tpu_custom_call.1} parent=11 // pred_fallthru
          _
        // Predicated region
        $region17: #{tpu_custom_call.1} parent=11 // pred_check
          %p297 = pneg %p149
        $region18: #{tpu_custom_call.1} parent=11 // pred_check_branch
          %299 = sbr.rel (%p297) target = $region20
        $region19: #{tpu_custom_call.1} parent=11 // pred_region
          _
        $region20: #{tpu_custom_call.1} parent=11 // pred_fallthru
          _
        // Predicated region
        $region21: #{tpu_custom_call.1} parent=11 // pred_check
          %p300 = pneg %p170
        $region22: #{tpu_custom_call.1} parent=11 // pred_check_branch
          %302 = sbr.rel (%p300) target = $region24
        $region23: #{tpu_custom_call.1} parent=11 // pred_region
          _
        $region24: #{tpu_custom_call.1} parent=11 // pred_fallthru
          _
        // Predicated region
        $region25: #{tpu_custom_call.1} parent=11 // pred_check
          %p303 = pneg %p191
        $region26: #{tpu_custom_call.1} parent=11 // pred_check_branch
          %305 = sbr.rel (%p303) target = $region28
        $region27: #{tpu_custom_call.1} parent=11 // pred_region
          _
        $region28: #{tpu_custom_call.1} parent=11 // pred_fallthru
          _
      $region12: #{tpu_custom_call.1} parent=5 // pred_fallthru
        _
      %p306 = scmp.lt.s32.totalorder %s29, 2
      // Predicated region
      $region29: #{tpu_custom_call.1} parent=5 // pred_check
        %p307 = pneg %p306
      $region30: #{tpu_custom_call.1} parent=5 // pred_check_branch
        %309 = sbr.rel (%p307) target = $region32
      $region31: #{tpu_custom_call.1} parent=5 // pred_region
        // Predicated region
        $region33: #{tpu_custom_call.1} parent=31 // pred_check
          %p310 = pneg %p49
        $region34: #{tpu_custom_call.1} parent=31 // pred_check_branch
          %312 = sbr.rel (%p310) target = $region36
        $region35: #{tpu_custom_call.1} parent=31 // pred_region
          %s313 = sand.u32 %s39, 1
          %s314 = scalar_lea.sflag [#allocation3], %s313
          %s315 = sand.u32 %s39, 1
          %s316 = smul.addr %s315, 20
          %s317 = scalar_lea.vmem [#allocation2], %s316
          %s319 = ssub.s32 320, 320
          %320 = vsyncadd %s314, %s319
          %s321 = smul.addr %s29, 64
          %s322 = scalar_lea.hbm %s0, %s321
          %s323 = sshll.u32 %s317, 4
          %s324 = int_to_ptr.vmem [resolvable:$true] %s323
          %329 = dma.hbm_to_vmem [thread:$0]  %s322, 320, %s324, %s314, 128, 64, 4
        $region36: #{tpu_custom_call.1} parent=31 // pred_fallthru
          _
        // Predicated region
        $region37: #{tpu_custom_call.1} parent=31 // pred_check
          %p330 = pneg %p75
        $region38: #{tpu_custom_call.1} parent=31 // pred_check_branch
          %332 = sbr.rel (%p330) target = $region40
        $region39: #{tpu_custom_call.1} parent=31 // pred_region
          %s333 = sand.u32 %s29, 1
          %s334 = scalar_lea.sflag [#allocation6], %s333
          %s335 = sand.u32 %s65, 1
          %s336 = smul.addr %s335, 28
          %s337 = scalar_lea.vmem [#allocation5], %s336
          %s339 = ssub.s32 448, 448
          %340 = vsyncadd %s334, %s339
          %s341 = smul.addr %s29, 64
          %s342 = scalar_lea.hbm %s1, %s341
          %s343 = sshll.u32 %s337, 4
          %s344 = int_to_ptr.vmem [resolvable:$true] %s343
          %349 = dma.hbm_to_vmem [thread:$0]  %s342, 448, %s344, %s334, 128, 64, 4
        $region40: #{tpu_custom_call.1} parent=31 // pred_fallthru
          _
        // Predicated region
        $region41: #{tpu_custom_call.1} parent=31 // pred_check
          %p350 = pneg %p101
        $region42: #{tpu_custom_call.1} parent=31 // pred_check_branch
          %352 = sbr.rel (%p350) target = $region44
        $region43: #{tpu_custom_call.1} parent=31 // pred_region
          %s353 = sand.u32 %s29, 1
          %s354 = scalar_lea.sflag [#allocation6], %s353
          %s355 = sand.u32 %s91, 1
          %s356 = smul.addr %s355, 20
          %s357 = scalar_lea.vmem [#allocation7], %s356
          %s359 = ssub.s32 320, 320
          %360 = vsyncadd %s354, %s359
          %s361 = smul.addr %s29, 64
          %s362 = scalar_lea.hbm %s2, %s361
          %s363 = sshll.u32 %s357, 4
          %s364 = int_to_ptr.vmem [resolvable:$true] %s363
          %369 = dma.hbm_to_vmem [thread:$0]  %s362, 320, %s364, %s354, 128, 64, 4
        $region44: #{tpu_custom_call.1} parent=31 // pred_fallthru
          _
      $region32: #{tpu_custom_call.1} parent=5 // pred_fallthru
        _
      %p370 = scmp.le.s32.totalorder 1, %s29
      %p371 = scmp.lt.s32.totalorder %s29, 3
      %p372 = pnand %p370, %p371
      %p373 = pneg %p372
      // Predicated region
      $region45: #{tpu_custom_call.1} parent=5 // pred_check
        _
      $region46: #{tpu_custom_call.1} parent=5 // pred_check_branch
        %375 = sbr.rel (%p372) target = $region48
      $region47: #{tpu_custom_call.1} parent=5 // pred_region
        %s376 = ssub.s32 %s29, 1
        %s377 = sand.u32 %s42, 1
        %s378 = scalar_lea.sflag [#allocation3], %s377
        %s379 = sand.u32 %s42, 1
        %s380 = smul.addr %s379, 20
        %s381 = scalar_lea.vmem [#allocation2], %s380
        // Predicated region
        $region49: #{tpu_custom_call.1} parent=47 // pred_check
          %p382 = pneg %p55
        $region50: #{tpu_custom_call.1} parent=47 // pred_check_branch
          %384 = sbr.rel (%p382) target = $region52
        $region51: #{tpu_custom_call.1} parent=47 // pred_region
          %385 = dma.done %s378, 320
        $region52: #{tpu_custom_call.1} parent=47 // pred_fallthru
          _
        %s386 = sand.u32 %s34, 1
        %s387 = scalar_lea.sflag [#allocation6], %s386
        %s388 = sand.u32 %s68, 1
        %s389 = smul.addr %s388, 28
        %s390 = scalar_lea.vmem [#allocation5], %s389
        // Predicated region
        $region53: #{tpu_custom_call.1} parent=47 // pred_check
          %p391 = pneg %p81
        $region54: #{tpu_custom_call.1} parent=47 // pred_check_branch
          %393 = sbr.rel (%p391) target = $region56
        $region55: #{tpu_custom_call.1} parent=47 // pred_region
          %394 = dma.done %s387, 448
        $region56: #{tpu_custom_call.1} parent=47 // pred_fallthru
          _
        %s395 = sand.u32 %s34, 1
        %s396 = scalar_lea.sflag [#allocation6], %s395
        %s397 = sand.u32 %s94, 1
        %s398 = smul.addr %s397, 20
        %s399 = scalar_lea.vmem [#allocation7], %s398
        // Predicated region
        $region57: #{tpu_custom_call.1} parent=47 // pred_check
          %p400 = pneg %p107
        $region58: #{tpu_custom_call.1} parent=47 // pred_check_branch
          %402 = sbr.rel (%p400) target = $region60
        $region59: #{tpu_custom_call.1} parent=47 // pred_region
          %403 = dma.done %s396, 320
        $region60: #{tpu_custom_call.1} parent=47 // pred_fallthru
          _
        // Predicated region
        $region61: #{tpu_custom_call.1} parent=47 // pred_check
          %p404 = pneg %p128
        $region62: #{tpu_custom_call.1} parent=47 // pred_check_branch
          %406 = sbr.rel (%p404) target = $region64
        $region63: #{tpu_custom_call.1} parent=47 // pred_region
          %407 = dma.done [#allocation9], 6144
        $region64: #{tpu_custom_call.1} parent=47 // pred_fallthru
          _
        %s408 = sand.u32 %s42, 1
        %s409 = scalar_lea.sflag [#allocation3], %s408
        %s410 = sand.u32 %s42, 1
        %s411 = smul.addr %s410, 20
        %s412 = scalar_lea.vmem [#allocation2], %s411
        %p413 = pneg %p55
        %p414 = pneg %p52
        %s415 = sand.u32 %s34, 1
        %s416 = scalar_lea.sflag [#allocation6], %s415
        %s417 = sand.u32 %s68, 1
        %s418 = smul.addr %s417, 28
        %s419 = scalar_lea.vmem [#allocation5], %s418
        %p420 = pneg %p81
        %p421 = pneg %p78
        %s422 = sand.u32 %s34, 1
        %s423 = scalar_lea.sflag [#allocation6], %s422
        %s424 = sand.u32 %s94, 1
        %s425 = smul.addr %s424, 20
        %s426 = scalar_lea.vmem [#allocation7], %s425
        %p427 = pneg %p107
        %p428 = pneg %p104
        %p429 = pneg %p128
        %p430 = pneg %p125
        %p431 = pneg %p149
        %p432 = pneg %p146
        %p433 = pneg %p170
        %p434 = pneg %p167
        %p435 = pneg %p191
        %p436 = pneg %p188
        %p437 = pneg %p217
        %p438 = pneg %p214
        %s439 = sand.u32 %s204, 1
        %s440 = scalar_lea.sflag [#allocation4], %s439
        %s441 = sand.u32 %s204, 1
        %s442 = smul.addr %s441, 40
        %s443 = scalar_lea.vmem [#allocation10], %s442
        %p444 = pneg %p243
        %p445 = pneg %p240
        %s446 = sand.u32 %s34, 1
        %s447 = scalar_lea.sflag [#allocation12], %s446
        %s448 = sand.u32 %s230, 1
        %s449 = smul.addr %s448, 40
        %s450 = scalar_lea.vmem [#allocation11], %s449
        %p451 = pneg %p269
        %p452 = pneg %p266
        %s453 = sand.u32 %s34, 1
        %s454 = scalar_lea.sflag [#allocation12], %s453
        %s455 = sand.u32 %s256, 1
        %s456 = smul.addr %s455, 40
        %s457 = scalar_lea.vmem [#allocation13], %s456
        %v459 = vld [vmem:[%s5] sm:$0xf]
        %v460 = vld [vmem:[%s5 + $0x4] sm:$0xf]
        %v461 = vld [vmem:[%s5 + $0x8] sm:$0xf]
        %v462 = vld [vmem:[%s5 + $0xc] sm:$0xf]
        %v463 = vld [vmem:[%s5 + $0x10] sm:$0xf]
        %v464 = vld [vmem:[%s5 + $0x14] sm:$0xf]
        %v465 = vld [vmem:[%s5 + $0x18] sm:$0xf]
        %v466 = vld [vmem:[%s5 + $0x1c] sm:$0xf]
        %v467 = vld [vmem:[%s5 + $0x20] sm:$0xf]
        %v468 = vld [vmem:[%s5 + $0x24] sm:$0xf]
        %v469 = vld [vmem:[%s390] sm:$0xf]
        %v470 = vld [vmem:[%s390 + $0x4] sm:$0xf]
        %v471 = vld [vmem:[%s390 + $0x8] sm:$0xf]
        %v472 = vld [vmem:[%s390 + $0xc] sm:$0xf]
        %v473 = vld [vmem:[%s390 + $0x10] sm:$0xf]
        %v474 = vld [vmem:[%s390 + $0x14] sm:$0xf]
        %v475 = vld [vmem:[%s390 + $0x18] sm:$0x1]
        %v476 = vld [vmem:[%s6] sm:$0xf]
        %v477 = vld [vmem:[%s6 + $0x4] sm:$0xf]
        %v478 = vld [vmem:[%s6 + $0x8] sm:$0xf]
        %v479 = vld [vmem:[%s6 + $0xc] sm:$0xf]
        %v480 = vld [vmem:[%s6 + $0x10] sm:$0xf]
        %v481 = vld [vmem:[%s6 + $0x14] sm:$0xf]
        %v482 = vld [vmem:[%s6 + $0x18] sm:$0xf]
        %v483 = vld [vmem:[%s6 + $0x1c] sm:$0xf]
        %v484 = vld [vmem:[%s6 + $0x20] sm:$0xf]
        %v485 = vld [vmem:[%s6 + $0x24] sm:$0xf]
        %v486 = vunpack.c.l.bf16 %v476
        %v487 = vunpack.c.l.bf16 %v477
        %v488 = vunpack.c.l.bf16 %v478
        %v489 = vunpack.c.l.bf16 %v479
        %v490 = vunpack.c.l.bf16 %v480
        %v491 = vunpack.c.l.bf16 %v481
        %v492 = vunpack.c.l.bf16 %v482
        %v493 = vunpack.c.l.bf16 %v483
        %v494 = vunpack.c.l.bf16 %v484
        %v495 = vunpack.c.l.bf16 %v485
        %v506 = vunpack.c.l.b16 %v459
        %v507 = vunpack.c.l.b16 %v460
        %v508 = vunpack.c.l.b16 %v461
        %v509 = vunpack.c.l.b16 %v462
        %v510 = vunpack.c.l.b16 %v463
        %v511 = vunpack.c.l.b16 %v464
        %v512 = vunpack.c.l.b16 %v465
        %v513 = vunpack.c.l.b16 %v466
        %v514 = vunpack.c.l.b16 %v467
        %v515 = vunpack.c.l.b16 %v468
        %v516 = vpack.c.b16 %v507, %v506
        %v517 = vpack.c.b16 %v509, %v508
        %v518 = vpack.c.b16 %v511, %v510
        %v519 = vpack.c.b16 %v513, %v512
        %v520 = vpack.c.b16 %v515, %v514
        %v528 = vunpack.c.l.b16 %v469
        %v529 = vunpack.c.l.b16 %v470
        %v530 = vunpack.c.l.b16 %v471
        %v531 = vunpack.c.l.b16 %v472
        %v532 = vunpack.c.l.b16 %v473
        %v533 = vunpack.c.l.b16 %v474
        %v534 = vunpack.c.l.b16 %v475
        %v535 = vpack.c.b16 %v529, %v528
        %v536 = vpack.c.b16 %v531, %v530
        %v537 = vpack.c.b16 %v533, %v532
        %v538 = vpack.c.b16 %v534, %v534
        %vm542 = vcmask 400384
        %v544 = vsel %vm542, %v516, 0
        %v547 = vsel %vm542, %v517, 0
        %v550 = vsel %vm542, %v518, 0
        %v553 = vsel %vm542, %v519, 0
        %v556 = vsel %vm542, %v520, 0
        %vm558 = vcmask 1040384
        %v559 = vsel 0, 4294967295, 65535
        %v560 = vsel %vm558, %v559, 0
        %v562 = vand.u32 %v538, %v560
        %564 = vmatprep.subr.bf16.mxu0 0
        %565 = vmatpush1.bf16.msra.mxu0 %v535
        %566 = vmatprep.subr.bf16.mxu0 0
        %567 = vmatpush1.bf16.msra.mxu0 %v536
        %568 = vmatprep.subr.bf16.mxu0 0
        %569 = vmatpush1.bf16.msra.mxu0 %v537
        %570 = vmatprep.subr.bf16.mxu0 0
        %571 = vmatpush1.bf16.msra.mxu0 %v562
        %572 = vmatprep.subr.bf16.mxu0 0
        %573 = vmatpush1.bf16.msra.mxu0 0
        %574 = vmatprep.subr.bf16.mxu0 0
        %575 = vmatpush1.bf16.msra.mxu0 0
        %576 = vmatprep.subr.bf16.mxu0 0
        %577 = vmatpush1.bf16.msra.mxu0 0
        %578 = vmatprep.subr.bf16.mxu0 0
        %579 = vmatpush1.bf16.msra.mxu0 0
        %580 = vmatprep.subr.bf16.mxu0 0
        %581 = vmatpush1.bf16.msra.mxu0 0
        %582 = vmatprep.subr.bf16.mxu0 0
        %583 = vmatpush1.bf16.msra.mxu0 0
        %584 = vmatprep.subr.bf16.mxu0 0
        %585 = vmatpush1.bf16.msra.mxu0 0
        %586 = vmatprep.subr.bf16.mxu0 0
        %587 = vmatpush1.bf16.msra.mxu0 0
        %588 = vmatprep.subr.bf16.mxu0 0
        %589 = vmatpush1.bf16.msra.mxu0 0
        %590 = vmatprep.subr.bf16.mxu0 0
        %591 = vmatpush1.bf16.msra.mxu0 0
        %592 = vmatprep.subr.bf16.mxu0 0
        %593 = vmatpush1.bf16.msra.mxu0 0
        %594 = vmatprep.subr.bf16.mxu0 0
        %595 = vmatpush1.bf16.msra.mxu0 0
        %596 = vmatprep.mubr.bf16.mxu0 0
        %597 = vmatmul.mubr.bf16.gmra.mrb[0].mxu0 %v544
        %v598 = vpop.f32.mrb[0].mxu0
        %v599 = vadd.f32 %v486, %v598
        %v600 = vpop.f32.mrb[0].mxu0
        %v601 = vpop.f32.mrb[0].mxu0
        %v602 = vadd.f32 %v487, %v601
        %v603 = vpop.f32.mrb[0].mxu0
        %604 = vmatprep.mubr.bf16.mxu0 0
        %605 = vmatmul.mubr.bf16.gmra.mrb[0].mxu0 %v547
        %v606 = vpop.f32.mrb[0].mxu0
        %v607 = vadd.f32 %v488, %v606
        %v608 = vpop.f32.mrb[0].mxu0
        %v609 = vpop.f32.mrb[0].mxu0
        %v610 = vadd.f32 %v489, %v609
        %v611 = vpop.f32.mrb[0].mxu0
        %612 = vmatprep.mubr.bf16.mxu0 0
        %613 = vmatmul.mubr.bf16.gmra.mrb[0].mxu0 %v550
        %v614 = vpop.f32.mrb[0].mxu0
        %v615 = vadd.f32 %v490, %v614
        %v616 = vpop.f32.mrb[0].mxu0
        %v617 = vpop.f32.mrb[0].mxu0
        %v618 = vadd.f32 %v491, %v617
        %v619 = vpop.f32.mrb[0].mxu0
        %620 = vmatprep.mubr.bf16.mxu0 0
        %621 = vmatmul.mubr.bf16.gmra.mrb[0].mxu0 %v553
        %v622 = vpop.f32.mrb[0].mxu0
        %v623 = vadd.f32 %v492, %v622
        %v624 = vpop.f32.mrb[0].mxu0
        %v625 = vpop.f32.mrb[0].mxu0
        %v626 = vadd.f32 %v493, %v625
        %v627 = vpop.f32.mrb[0].mxu0
        %628 = vmatprep.mubr.bf16.mxu0 0
        %629 = vmatmul.mubr.bf16.gmra.mrb[0].mxu0 %v556
        %v630 = vpop.f32.mrb[0].mxu0
        %v631 = vadd.f32 %v494, %v630
        %v632 = vpop.f32.mrb[0].mxu0
        %v633 = vpop.f32.mrb[0].mxu0
        %v634 = vadd.f32 %v495, %v633
        %v635 = vpop.f32.mrb[0].mxu0
        %636 = vdwg.mxu0
        %v637 = vmul.f32 %v599, %v599
        %v638 = vmul.f32 %v602, %v602
        %v639 = vmul.f32 %v607, %v607
        %v640 = vmul.f32 %v610, %v610
        %v641 = vmul.f32 %v615, %v615
        %v642 = vmul.f32 %v618, %v618
        %v643 = vmul.f32 %v623, %v623
        %v644 = vmul.f32 %v626, %v626
        %v645 = vmul.f32 %v631, %v631
        %v646 = vmul.f32 %v634, %v634
        %v647 = vmul.f32 %v599, %v637
        %v648 = vmul.f32 %v602, %v638
        %v649 = vmul.f32 %v607, %v639
        %v650 = vmul.f32 %v610, %v640
        %v651 = vmul.f32 %v615, %v641
        %v652 = vmul.f32 %v618, %v642
        %v653 = vmul.f32 %v623, %v643
        %v654 = vmul.f32 %v626, %v644
        %v655 = vmul.f32 %v631, %v645
        %v656 = vmul.f32 %v634, %v646
        %v657 = vmul.f32 %v647, 0.044715
        %v658 = vmul.f32 %v648, 0.044715
        %v659 = vmul.f32 %v649, 0.044715
        %v660 = vmul.f32 %v650, 0.044715
        %v661 = vmul.f32 %v651, 0.044715
        %v662 = vmul.f32 %v652, 0.044715
        %v663 = vmul.f32 %v653, 0.044715
        %v664 = vmul.f32 %v654, 0.044715
        %v665 = vmul.f32 %v655, 0.044715
        %v666 = vmul.f32 %v656, 0.044715
        %v667 = vadd.f32 %v599, %v657
        %v668 = vadd.f32 %v602, %v658
        %v669 = vadd.f32 %v607, %v659
        %v670 = vadd.f32 %v610, %v660
        %v671 = vadd.f32 %v615, %v661
        %v672 = vadd.f32 %v618, %v662
        %v673 = vadd.f32 %v623, %v663
        %v674 = vadd.f32 %v626, %v664
        %v675 = vadd.f32 %v631, %v665
        %v676 = vadd.f32 %v634, %v666
        %v677 = vmul.f32 %v667, 0.7978846
        %v678 = vmul.f32 %v668, 0.7978846
        %v679 = vmul.f32 %v669, 0.7978846
        %v680 = vmul.f32 %v670, 0.7978846
        %v681 = vmul.f32 %v671, 0.7978846
        %v682 = vmul.f32 %v672, 0.7978846
        %v683 = vmul.f32 %v673, 0.7978846
        %v684 = vmul.f32 %v674, 0.7978846
        %v685 = vmul.f32 %v675, 0.7978846
        %v686 = vmul.f32 %v676, 0.7978846
        %v687 = vtanh.pop %v677
        %v688 = vtanh.pop %v678
        %v689 = vtanh.pop %v679
        %v690 = vtanh.pop %v680
        %v691 = vtanh.pop %v681
        %v692 = vtanh.pop %v682
        %v693 = vtanh.pop %v683
        %v694 = vtanh.pop %v684
        %v695 = vtanh.pop %v685
        %v696 = vtanh.pop %v686
        %v697 = vadd.f32 %v687, 1.0
        %v698 = vadd.f32 %v688, 1.0
        %v699 = vadd.f32 %v689, 1.0
        %v700 = vadd.f32 %v690, 1.0
        %v701 = vadd.f32 %v691, 1.0
        %v702 = vadd.f32 %v692, 1.0
        %v703 = vadd.f32 %v693, 1.0
        %v704 = vadd.f32 %v694, 1.0
        %v705 = vadd.f32 %v695, 1.0
        %v706 = vadd.f32 %v696, 1.0
        %v707 = vmul.f32 %v697, 0.5
        %v708 = vmul.f32 %v698, 0.5
        %v709 = vmul.f32 %v699, 0.5
        %v710 = vmul.f32 %v700, 0.5
        %v711 = vmul.f32 %v701, 0.5
        %v712 = vmul.f32 %v702, 0.5
        %v713 = vmul.f32 %v703, 0.5
        %v714 = vmul.f32 %v704, 0.5
        %v715 = vmul.f32 %v705, 0.5
        %v716 = vmul.f32 %v706, 0.5
        %v717 = vmul.f32 %v599, %v707
        %v718 = vmul.f32 %v602, %v708
        %v719 = vmul.f32 %v607, %v709
        %v720 = vmul.f32 %v610, %v710
        %v721 = vmul.f32 %v615, %v711
        %v722 = vmul.f32 %v618, %v712
        %v723 = vmul.f32 %v623, %v713
        %v724 = vmul.f32 %v626, %v714
        %v725 = vmul.f32 %v631, %v715
        %v726 = vmul.f32 %v634, %v716
        %v727 = vpack.c.bf16 %v718, %v717
        %v728 = vpack.c.bf16 %v720, %v719
        %v729 = vpack.c.bf16 %v721, %v721
        %v730 = vpack.c.bf16 %v723, %v722
        %v731 = vpack.c.bf16 %v725, %v724
        %v732 = vpack.c.bf16 %v726, %v726
        %v733 = vld [vmem:[#allocation8 + $0x80] sm:$0xf]
        %v734 = vld [vmem:[#allocation8 + $0x84] sm:$0xf]
        %v735 = vld [vmem:[#allocation8 + $0x88] sm:$0xf]
        %v736 = vld [vmem:[#allocation8 + $0x8c] sm:$0xf]
        %v737 = vld [vmem:[#allocation8 + $0x90] sm:$0xf]
        %v738 = vld [vmem:[#allocation8 + $0x94] sm:$0xf]
        %v739 = vld [vmem:[#allocation8 + $0x98] sm:$0xf]
        %v740 = vld [vmem:[#allocation8 + $0x9c] sm:$0xf]
        %v741 = vld [vmem:[#allocation8 + $0xa0] sm:$0xf]
        %v742 = vld [vmem:[#allocation8 + $0xa4] sm:$0xf]
        %v743 = vld [vmem:[#allocation8 + $0xa8] sm:$0xf]
        %v744 = vld [vmem:[#allocation8 + $0xac] sm:$0xf]
        %v745 = vld [vmem:[#allocation8 + $0xb0] sm:$0xf]
        %v746 = vld [vmem:[#allocation8 + $0xb4] sm:$0xf]
        %v747 = vld [vmem:[#allocation8 + $0xb8] sm:$0xf]
        %v748 = vld [vmem:[#allocation8 + $0xbc] sm:$0xf]
        %v749 = vld [vmem:[%s4] sm:$0x2]
        %v750 = vunpack.c.l.bf16 %v749
        %v751 = vlaneseq
        %v752 = vshrl.u32 %v751, 7
        %v753 = vsub.s32 2, %v752
        %v754 = vrot.slane %v750, %v753
        %v771 = vunpack.c.l.b16 %v733
        %v772 = vunpack.c.l.b16 %v734
        %v773 = vunpack.c.l.b16 %v735
        %v774 = vunpack.c.l.b16 %v736
        %v775 = vunpack.c.l.b16 %v737
        %v776 = vunpack.c.l.b16 %v738
        %v777 = vunpack.c.l.b16 %v739
        %v778 = vunpack.c.l.b16 %v740
        %v779 = vunpack.c.l.b16 %v741
        %v780 = vunpack.c.l.b16 %v742
        %v781 = vunpack.c.l.b16 %v743
        %v782 = vunpack.c.l.b16 %v744
        %v783 = vunpack.c.l.b16 %v745
        %v784 = vunpack.c.l.b16 %v746
        %v785 = vunpack.c.l.b16 %v747
        %v786 = vunpack.c.l.b16 %v748
        %v787 = vpack.c.b16 %v772, %v771
        %v788 = vpack.c.b16 %v774, %v773
        %v789 = vpack.c.b16 %v776, %v775
        %v790 = vpack.c.b16 %v778, %v777
        %v791 = vpack.c.b16 %v780, %v779
        %v792 = vpack.c.b16 %v782, %v781
        %v793 = vpack.c.b16 %v784, %v783
        %v794 = vpack.c.b16 %v786, %v785
        %803 = vmatprep.subr.bf16.mxu0 0
        %804 = vmatpush1.bf16.msra.mxu0 %v787
        %805 = vmatprep.subr.bf16.mxu0 0
        %806 = vmatpush1.bf16.msra.mxu0 %v788
        %807 = vmatprep.subr.bf16.mxu0 0
        %808 = vmatpush1.bf16.msra.mxu0 %v789
        %809 = vmatprep.subr.bf16.mxu0 0
        %810 = vmatpush1.bf16.msra.mxu0 %v790
        %811 = vmatprep.subr.bf16.mxu0 0
        %812 = vmatpush1.bf16.msra.mxu0 %v791
        %813 = vmatprep.subr.bf16.mxu0 0
        %814 = vmatpush1.bf16.msra.mxu0 %v792
        %815 = vmatprep.subr.bf16.mxu0 0
        %816 = vmatpush1.bf16.msra.mxu0 %v793
        %817 = vmatprep.subr.bf16.mxu0 0
        %818 = vmatpush1.bf16.msra.mxu0 %v794
        %819 = vmatprep.subr.bf16.mxu0 0
        %820 = vmatpush1.bf16.msra.mxu0 0
        %821 = vmatprep.subr.bf16.mxu0 0
        %822 = vmatpush1.bf16.msra.mxu0 0
        %823 = vmatprep.subr.bf16.mxu0 0
        %824 = vmatpush1.bf16.msra.mxu0 0
        %825 = vmatprep.subr.bf16.mxu0 0
        %826 = vmatpush1.bf16.msra.mxu0 0
        %827 = vmatprep.subr.bf16.mxu0 0
        %828 = vmatpush1.bf16.msra.mxu0 0
        %829 = vmatprep.subr.bf16.mxu0 0
        %830 = vmatpush1.bf16.msra.mxu0 0
        %831 = vmatprep.subr.bf16.mxu0 0
        %832 = vmatpush1.bf16.msra.mxu0 0
        %833 = vmatprep.subr.bf16.mxu0 0
        %834 = vmatpush1.bf16.msra.mxu0 0
        %835 = vmatprep.mubr.bf16.mxu0 0
        %836 = vmatmul.mubr.bf16.gmra.mrb[0].mxu0 %v727
        %v837 = vpop.f32.mrb[0].mxu0
        %v838 = vadd.f32 %v754, %v837
        %v839 = vpop.f32.mrb[0].mxu0
        %v840 = vpop.f32.mrb[0].mxu0
        %v841 = vadd.f32 %v754, %v840
        %v842 = vpop.f32.mrb[0].mxu0
        %843 = vmatprep.mubr.bf16.mxu0 0
        %844 = vmatmul.mubr.bf16.gmra.mrb[0].mxu0 %v728
        %v845 = vpop.f32.mrb[0].mxu0
        %v846 = vadd.f32 %v754, %v845
        %v847 = vpop.f32.mrb[0].mxu0
        %v848 = vpop.f32.mrb[0].mxu0
        %v849 = vadd.f32 %v754, %v848
        %v850 = vpop.f32.mrb[0].mxu0
        %851 = vmatprep.mubr.bf16.mxu0 0
        %852 = vmatmul.mubr.bf16.gmra.mrb[0].mxu0 %v729
        %v853 = vpop.f32.mrb[0].mxu0
        %v854 = vadd.f32 %v754, %v853
        %v855 = vpop.f32.mrb[0].mxu0
        %v856 = vpop.f32.mrb[0].mxu0
        %v857 = vpop.f32.mrb[0].mxu0
        %858 = vdwg.mxu0
        %v859 = vld [vmem:[#allocation8 + $0x140] sm:$0xf]
        %v860 = vld [vmem:[#allocation8 + $0x144] sm:$0xf]
        %v861 = vld [vmem:[#allocation8 + $0x148] sm:$0xf]
        %v862 = vld [vmem:[#allocation8 + $0x14c] sm:$0xf]
        %v863 = vld [vmem:[#allocation8 + $0x150] sm:$0xf]
        %v864 = vld [vmem:[#allocation8 + $0x154] sm:$0xf]
        %v865 = vld [vmem:[#allocation8 + $0x158] sm:$0xf]
        %v866 = vld [vmem:[#allocation8 + $0x15c] sm:$0xf]
        %v867 = vld [vmem:[#allocation8 + $0x160] sm:$0xf]
        %v868 = vld [vmem:[#allocation8 + $0x164] sm:$0xf]
        %v869 = vld [vmem:[#allocation8 + $0x168] sm:$0xf]
        %v870 = vld [vmem:[#allocation8 + $0x16c] sm:$0xf]
        %v871 = vld [vmem:[#allocation8 + $0x170] sm:$0xf]
        %v872 = vld [vmem:[#allocation8 + $0x174] sm:$0xf]
        %v873 = vld [vmem:[#allocation8 + $0x178] sm:$0xf]
        %v874 = vld [vmem:[#allocation8 + $0x17c] sm:$0xf]
        %v875 = vld [vmem:[%s4] sm:$0x4]
        %v876 = vunpack.c.l.bf16 %v875
        %v877 = vlaneseq
        %v878 = vshrl.u32 %v877, 7
        %v879 = vsub.s32 5, %v878
        %v880 = vrot.slane %v876, %v879
        %v897 = vunpack.c.l.b16 %v859
        %v898 = vunpack.c.l.b16 %v860
        %v899 = vunpack.c.l.b16 %v861
        %v900 = vunpack.c.l.b16 %v862
        %v901 = vunpack.c.l.b16 %v863
        %v902 = vunpack.c.l.b16 %v864
        %v903 = vunpack.c.l.b16 %v865
        %v904 = vunpack.c.l.b16 %v866
        %v905 = vunpack.c.l.b16 %v867
        %v906 = vunpack.c.l.b16 %v868
        %v907 = vunpack.c.l.b16 %v869
        %v908 = vunpack.c.l.b16 %v870
        %v909 = vunpack.c.l.b16 %v871
        %v910 = vunpack.c.l.b16 %v872
        %v911 = vunpack.c.l.b16 %v873
        %v912 = vunpack.c.l.b16 %v874
        %v913 = vpack.c.b16 %v898, %v897
        %v914 = vpack.c.b16 %v900, %v899
        %v915 = vpack.c.b16 %v902, %v901
        %v916 = vpack.c.b16 %v904, %v903
        %v917 = vpack.c.b16 %v906, %v905
        %v918 = vpack.c.b16 %v908, %v907
        %v919 = vpack.c.b16 %v910, %v909
        %v920 = vpack.c.b16 %v912, %v911
        %929 = vmatprep.subr.bf16.mxu0 0
        %930 = vmatpush1.bf16.msra.mxu0 %v913
        %931 = vmatprep.subr.bf16.mxu0 0
        %932 = vmatpush1.bf16.msra.mxu0 %v914
        %933 = vmatprep.subr.bf16.mxu0 0
        %934 = vmatpush1.bf16.msra.mxu0 %v915
        %935 = vmatprep.subr.bf16.mxu0 0
        %936 = vmatpush1.bf16.msra.mxu0 %v916
        %937 = vmatprep.subr.bf16.mxu0 0
        %938 = vmatpush1.bf16.msra.mxu0 %v917
        %939 = vmatprep.subr.bf16.mxu0 0
        %940 = vmatpush1.bf16.msra.mxu0 %v918
        %941 = vmatprep.subr.bf16.mxu0 0
        %942 = vmatpush1.bf16.msra.mxu0 %v919
        %943 = vmatprep.subr.bf16.mxu0 0
        %944 = vmatpush1.bf16.msra.mxu0 %v920
        %945 = vmatprep.subr.bf16.mxu0 0
        %946 = vmatpush1.bf16.msra.mxu0 0
        %947 = vmatprep.subr.bf16.mxu0 0
        %948 = vmatpush1.bf16.msra.mxu0 0
        %949 = vmatprep.subr.bf16.mxu0 0
        %950 = vmatpush1.bf16.msra.mxu0 0
        %951 = vmatprep.subr.bf16.mxu0 0
        %952 = vmatpush1.bf16.msra.mxu0 0
        %953 = vmatprep.subr.bf16.mxu0 0
        %954 = vmatpush1.bf16.msra.mxu0 0
        %955 = vmatprep.subr.bf16.mxu0 0
        %956 = vmatpush1.bf16.msra.mxu0 0
        %957 = vmatprep.subr.bf16.mxu0 0
        %958 = vmatpush1.bf16.msra.mxu0 0
        %959 = vmatprep.subr.bf16.mxu0 0
        %960 = vmatpush1.bf16.msra.mxu0 0
        %961 = vmatprep.mubr.bf16.mxu0 0
        %962 = vmatmul.mubr.bf16.gmra.mrb[0].mxu0 %v730
        %v963 = vpop.f32.mrb[0].mxu0
        %v964 = vadd.f32 %v880, %v963
        %v965 = vpop.f32.mrb[0].mxu0
        %v966 = vpop.f32.mrb[0].mxu0
        %v967 = vadd.f32 %v880, %v966
        %v968 = vpop.f32.mrb[0].mxu0
        %969 = vmatprep.mubr.bf16.mxu0 0
        %970 = vmatmul.mubr.bf16.gmra.mrb[0].mxu0 %v731
        %v971 = vpop.f32.mrb[0].mxu0
        %v972 = vadd.f32 %v880, %v971
        %v973 = vpop.f32.mrb[0].mxu0
        %v974 = vpop.f32.mrb[0].mxu0
        %v975 = vadd.f32 %v880, %v974
        %v976 = vpop.f32.mrb[0].mxu0
        %977 = vmatprep.mubr.bf16.mxu0 0
        %978 = vmatmul.mubr.bf16.gmra.mrb[0].mxu0 %v732
        %v979 = vpop.f32.mrb[0].mxu0
        %v980 = vadd.f32 %v880, %v979
        %v981 = vpop.f32.mrb[0].mxu0
        %v982 = vpop.f32.mrb[0].mxu0
        %v983 = vpop.f32.mrb[0].mxu0
        %984 = vdwg.mxu0
        %985 = vst [vmem:[%s450] sm:$0xff] %v964
        %986 = vst [vmem:[%s450 + $0x8] sm:$0xff] %v967
        %987 = vst [vmem:[%s450 + $0x10] sm:$0xff] %v972
        %988 = vst [vmem:[%s450 + $0x18] sm:$0xff] %v975
        %989 = vst [vmem:[%s450 + $0x20] sm:$0xff] %v980
        %990 = vst [vmem:[%s457] sm:$0xff] %v838
        %991 = vst [vmem:[%s457 + $0x8] sm:$0xff] %v841
        %992 = vst [vmem:[%s457 + $0x10] sm:$0xff] %v846
        %993 = vst [vmem:[%s457 + $0x18] sm:$0xff] %v849
        %994 = vst [vmem:[%s457 + $0x20] sm:$0xff] %v854
        %v995 = vld [vmem:[#allocation8 + $0x40] sm:$0xf]
        %v996 = vld [vmem:[#allocation8 + $0x44] sm:$0xf]
        %v997 = vld [vmem:[#allocation8 + $0x48] sm:$0xf]
        %v998 = vld [vmem:[#allocation8 + $0x4c] sm:$0xf]
        %v999 = vld [vmem:[#allocation8 + $0x50] sm:$0xf]
        %v1000 = vld [vmem:[#allocation8 + $0x54] sm:$0xf]
        %v1001 = vld [vmem:[#allocation8 + $0x58] sm:$0xf]
        %v1002 = vld [vmem:[#allocation8 + $0x5c] sm:$0xf]
        %v1003 = vld [vmem:[#allocation8 + $0x60] sm:$0xf]
        %v1004 = vld [vmem:[#allocation8 + $0x64] sm:$0xf]
        %v1005 = vld [vmem:[#allocation8 + $0x68] sm:$0xf]
        %v1006 = vld [vmem:[#allocation8 + $0x6c] sm:$0xf]
        %v1007 = vld [vmem:[#allocation8 + $0x70] sm:$0xf]
        %v1008 = vld [vmem:[#allocation8 + $0x74] sm:$0xf]
        %v1009 = vld [vmem:[#allocation8 + $0x78] sm:$0xf]
        %v1010 = vld [vmem:[#allocation8 + $0x7c] sm:$0xf]
        %v1011 = vld [vmem:[%s4] sm:$0x1]
        %v1012 = vunpack.c.l.bf16 %v1011
        %v1013 = vlaneseq
        %v1014 = vshrl.u32 %v1013, 7
        %v1015 = vsub.s32 1, %v1014
        %v1016 = vrot.slane %v1012, %v1015
        %v1033 = vunpack.c.l.b16 %v995
        %v1034 = vunpack.c.l.b16 %v996
        %v1035 = vunpack.c.l.b16 %v997
        %v1036 = vunpack.c.l.b16 %v998
        %v1037 = vunpack.c.l.b16 %v999
        %v1038 = vunpack.c.l.b16 %v1000
        %v1039 = vunpack.c.l.b16 %v1001
        %v1040 = vunpack.c.l.b16 %v1002
        %v1041 = vunpack.c.l.b16 %v1003
        %v1042 = vunpack.c.l.b16 %v1004
        %v1043 = vunpack.c.l.b16 %v1005
        %v1044 = vunpack.c.l.b16 %v1006
        %v1045 = vunpack.c.l.b16 %v1007
        %v1046 = vunpack.c.l.b16 %v1008
        %v1047 = vunpack.c.l.b16 %v1009
        %v1048 = vunpack.c.l.b16 %v1010
        %v1049 = vpack.c.b16 %v1034, %v1033
        %v1050 = vpack.c.b16 %v1036, %v1035
        %v1051 = vpack.c.b16 %v1038, %v1037
        %v1052 = vpack.c.b16 %v1040, %v1039
        %v1053 = vpack.c.b16 %v1042, %v1041
        %v1054 = vpack.c.b16 %v1044, %v1043
        %v1055 = vpack.c.b16 %v1046, %v1045
        %v1056 = vpack.c.b16 %v1048, %v1047
        %1065 = vmatprep.subr.bf16.mxu0 0
        %1066 = vmatpush1.bf16.msra.mxu0 %v1049
        %1067 = vmatprep.subr.bf16.mxu0 0
        %1068 = vmatpush1.bf16.msra.mxu0 %v1050
        %1069 = vmatprep.subr.bf16.mxu0 0
        %1070 = vmatpush1.bf16.msra.mxu0 %v1051
        %1071 = vmatprep.subr.bf16.mxu0 0
        %1072 = vmatpush1.bf16.msra.mxu0 %v1052
        %1073 = vmatprep.subr.bf16.mxu0 0
        %1074 = vmatpush1.bf16.msra.mxu0 %v1053
        %1075 = vmatprep.subr.bf16.mxu0 0
        %1076 = vmatpush1.bf16.msra.mxu0 %v1054
        %1077 = vmatprep.subr.bf16.mxu0 0
        %1078 = vmatpush1.bf16.msra.mxu0 %v1055
        %1079 = vmatprep.subr.bf16.mxu0 0
        %1080 = vmatpush1.bf16.msra.mxu0 %v1056
        %1081 = vmatprep.subr.bf16.mxu0 0
        %1082 = vmatpush1.bf16.msra.mxu0 0
        %1083 = vmatprep.subr.bf16.mxu0 0
        %1084 = vmatpush1.bf16.msra.mxu0 0
        %1085 = vmatprep.subr.bf16.mxu0 0
        %1086 = vmatpush1.bf16.msra.mxu0 0
        %1087 = vmatprep.subr.bf16.mxu0 0
        %1088 = vmatpush1.bf16.msra.mxu0 0
        %1089 = vmatprep.subr.bf16.mxu0 0
        %1090 = vmatpush1.bf16.msra.mxu0 0
        %1091 = vmatprep.subr.bf16.mxu0 0
        %1092 = vmatpush1.bf16.msra.mxu0 0
        %1093 = vmatprep.subr.bf16.mxu0 0
        %1094 = vmatpush1.bf16.msra.mxu0 0
        %1095 = vmatprep.subr.bf16.mxu0 0
        %1096 = vmatpush1.bf16.msra.mxu0 0
        %1097 = vmatprep.mubr.bf16.mxu0 0
        %1098 = vmatmul.mubr.bf16.gmra.mrb[0].mxu0 %v730
        %v1099 = vpop.f32.mrb[0].mxu0
        %v1100 = vadd.f32 %v1016, %v1099
        %v1101 = vpop.f32.mrb[0].mxu0
        %v1102 = vpop.f32.mrb[0].mxu0
        %v1103 = vadd.f32 %v1016, %v1102
        %v1104 = vpop.f32.mrb[0].mxu0
        %1105 = vmatprep.mubr.bf16.mxu0 0
        %1106 = vmatmul.mubr.bf16.gmra.mrb[0].mxu0 %v731
        %v1107 = vpop.f32.mrb[0].mxu0
        %v1108 = vadd.f32 %v1016, %v1107
        %v1109 = vpop.f32.mrb[0].mxu0
        %v1110 = vpop.f32.mrb[0].mxu0
        %v1111 = vadd.f32 %v1016, %v1110
        %v1112 = vpop.f32.mrb[0].mxu0
        %1113 = vmatprep.mubr.bf16.mxu0 0
        %1114 = vmatmul.mubr.bf16.gmra.mrb[0].mxu0 %v732
        %v1115 = vpop.f32.mrb[0].mxu0
        %v1116 = vadd.f32 %v1016, %v1115
        %v1117 = vpop.f32.mrb[0].mxu0
        %v1118 = vpop.f32.mrb[0].mxu0
        %v1119 = vpop.f32.mrb[0].mxu0
        %1120 = vdwg.mxu0
        %v1121 = vld [vmem:[#allocation8] sm:$0xf]
        %v1122 = vld [vmem:[#allocation8 + $0x4] sm:$0xf]
        %v1123 = vld [vmem:[#allocation8 + $0x8] sm:$0xf]
        %v1124 = vld [vmem:[#allocation8 + $0xc] sm:$0xf]
        %v1125 = vld [vmem:[#allocation8 + $0x10] sm:$0xf]
        %v1126 = vld [vmem:[#allocation8 + $0x14] sm:$0xf]
        %v1127 = vld [vmem:[#allocation8 + $0x18] sm:$0xf]
        %v1128 = vld [vmem:[#allocation8 + $0x1c] sm:$0xf]
        %v1129 = vld [vmem:[#allocation8 + $0x20] sm:$0xf]
        %v1130 = vld [vmem:[#allocation8 + $0x24] sm:$0xf]
        %v1131 = vld [vmem:[#allocation8 + $0x28] sm:$0xf]
        %v1132 = vld [vmem:[#allocation8 + $0x2c] sm:$0xf]
        %v1133 = vld [vmem:[#allocation8 + $0x30] sm:$0xf]
        %v1134 = vld [vmem:[#allocation8 + $0x34] sm:$0xf]
        %v1135 = vld [vmem:[#allocation8 + $0x38] sm:$0xf]
        %v1136 = vld [vmem:[#allocation8 + $0x3c] sm:$0xf]
        %v1137 = vld [vmem:[%s381] sm:$0xf]
        %v1138 = vld [vmem:[%s381 + $0x4] sm:$0xf]
        %v1139 = vld [vmem:[%s381 + $0x8] sm:$0xf]
        %v1140 = vld [vmem:[%s381 + $0xc] sm:$0xf]
        %v1141 = vld [vmem:[%s381 + $0x10] sm:$0xf]
        %v1142 = vlaneseq
        %v1143 = vshrl.u32 %v1142, 7
        %v1144 = vsub.s32 0, %v1143
        %v1145 = vrot.slane %v1012, %v1144
        %v1151 = vunpack.c.l.b16 %v1137
        %v1152 = vunpack.c.l.b16 %v1138
        %v1153 = vunpack.c.l.b16 %v1139
        %v1154 = vunpack.c.l.b16 %v1140
        %v1155 = vunpack.c.l.b16 %v1141
        %v1156 = vpack.c.b16 %v1152, %v1151
        %v1157 = vpack.c.b16 %v1154, %v1153
        %v1158 = vpack.c.b16 %v1155, %v1155
        %v1178 = vunpack.c.l.b16 %v1121
        %v1179 = vunpack.c.l.b16 %v1122
        %v1180 = vunpack.c.l.b16 %v1123
        %v1181 = vunpack.c.l.b16 %v1124
        %v1182 = vunpack.c.l.b16 %v1125
        %v1183 = vunpack.c.l.b16 %v1126
        %v1184 = vunpack.c.l.b16 %v1127
        %v1185 = vunpack.c.l.b16 %v1128
        %v1186 = vunpack.c.l.b16 %v1129
        %v1187 = vunpack.c.l.b16 %v1130
        %v1188 = vunpack.c.l.b16 %v1131
        %v1189 = vunpack.c.l.b16 %v1132
        %v1190 = vunpack.c.l.b16 %v1133
        %v1191 = vunpack.c.l.b16 %v1134
        %v1192 = vunpack.c.l.b16 %v1135
        %v1193 = vunpack.c.l.b16 %v1136
        %v1194 = vpack.c.b16 %v1179, %v1178
        %v1195 = vpack.c.b16 %v1181, %v1180
        %v1196 = vpack.c.b16 %v1183, %v1182
        %v1197 = vpack.c.b16 %v1185, %v1184
        %v1198 = vpack.c.b16 %v1187, %v1186
        %v1199 = vpack.c.b16 %v1189, %v1188
        %v1200 = vpack.c.b16 %v1191, %v1190
        %v1201 = vpack.c.b16 %v1193, %v1192
        %1210 = vmatprep.subr.bf16.mxu0 0
        %1211 = vmatpush1.bf16.msra.mxu0 %v1194
        %1212 = vmatprep.subr.bf16.mxu0 0
        %1213 = vmatpush1.bf16.msra.mxu0 %v1195
        %1214 = vmatprep.subr.bf16.mxu0 0
        %1215 = vmatpush1.bf16.msra.mxu0 %v1196
        %1216 = vmatprep.subr.bf16.mxu0 0
        %1217 = vmatpush1.bf16.msra.mxu0 %v1197
        %1218 = vmatprep.subr.bf16.mxu0 0
        %1219 = vmatpush1.bf16.msra.mxu0 %v1198
        %1220 = vmatprep.subr.bf16.mxu0 0
        %1221 = vmatpush1.bf16.msra.mxu0 %v1199
        %1222 = vmatprep.subr.bf16.mxu0 0
        %1223 = vmatpush1.bf16.msra.mxu0 %v1200
        %1224 = vmatprep.subr.bf16.mxu0 0
        %1225 = vmatpush1.bf16.msra.mxu0 %v1201
        %1226 = vmatprep.subr.bf16.mxu0 0
        %1227 = vmatpush1.bf16.msra.mxu0 0
        %1228 = vmatprep.subr.bf16.mxu0 0
        %1229 = vmatpush1.bf16.msra.mxu0 0
        %1230 = vmatprep.subr.bf16.mxu0 0
        %1231 = vmatpush1.bf16.msra.mxu0 0
        %1232 = vmatprep.subr.bf16.mxu0 0
        %1233 = vmatpush1.bf16.msra.mxu0 0
        %1234 = vmatprep.subr.bf16.mxu0 0
        %1235 = vmatpush1.bf16.msra.mxu0 0
        %1236 = vmatprep.subr.bf16.mxu0 0
        %1237 = vmatpush1.bf16.msra.mxu0 0
        %1238 = vmatprep.subr.bf16.mxu0 0
        %1239 = vmatpush1.bf16.msra.mxu0 0
        %1240 = vmatprep.subr.bf16.mxu0 0
        %1241 = vmatpush1.bf16.msra.mxu0 0
        %1242 = vmatprep.mubr.bf16.mxu0 0
        %1243 = vmatmul.mubr.bf16.gmra.mrb[0].mxu0 %v1156
        %v1244 = vpop.f32.mrb[0].mxu0
        %v1245 = vadd.f32 %v1145, %v1244
        %v1246 = vpop.f32.mrb[0].mxu0
        %v1247 = vpop.f32.mrb[0].mxu0
        %v1248 = vadd.f32 %v1145, %v1247
        %v1249 = vpop.f32.mrb[0].mxu0
        %1250 = vmatprep.mubr.bf16.mxu0 0
        %1251 = vmatmul.mubr.bf16.gmra.mrb[0].mxu0 %v1157
        %v1252 = vpop.f32.mrb[0].mxu0
        %v1253 = vadd.f32 %v1145, %v1252
        %v1254 = vpop.f32.mrb[0].mxu0
        %v1255 = vpop.f32.mrb[0].mxu0
        %v1256 = vadd.f32 %v1145, %v1255
        %v1257 = vpop.f32.mrb[0].mxu0
        %1258 = vmatprep.mubr.bf16.mxu0 0
        %1259 = vmatmul.mubr.bf16.gmra.mrb[0].mxu0 %v1158
        %v1260 = vpop.f32.mrb[0].mxu0
        %v1261 = vadd.f32 %v1145, %v1260
        %v1262 = vpop.f32.mrb[0].mxu0
        %v1263 = vpop.f32.mrb[0].mxu0
        %v1264 = vpop.f32.mrb[0].mxu0
        %1265 = vdwg.mxu0
        %v1266 = vmul.f32 %v1245, %v1100
        %v1267 = vmul.f32 %v1248, %v1103
        %v1268 = vmul.f32 %v1253, %v1108
        %v1269 = vmul.f32 %v1256, %v1111
        %v1270 = vmul.f32 %v1261, %v1116
        %v1271 = vld [vmem:[#allocation8 + $0xc0] sm:$0xf]
        %v1272 = vld [vmem:[#allocation8 + $0xc4] sm:$0xf]
        %v1273 = vld [vmem:[#allocation8 + $0xc8] sm:$0xf]
        %v1274 = vld [vmem:[#allocation8 + $0xcc] sm:$0xf]
        %v1275 = vld [vmem:[#allocation8 + $0xd0] sm:$0xf]
        %v1276 = vld [vmem:[#allocation8 + $0xd4] sm:$0xf]
        %v1277 = vld [vmem:[#allocation8 + $0xd8] sm:$0xf]
        %v1278 = vld [vmem:[#allocation8 + $0xdc] sm:$0xf]
        %v1279 = vld [vmem:[#allocation8 + $0xe0] sm:$0xf]
        %v1280 = vld [vmem:[#allocation8 + $0xe4] sm:$0xf]
        %v1281 = vld [vmem:[#allocation8 + $0xe8] sm:$0xf]
        %v1282 = vld [vmem:[#allocation8 + $0xec] sm:$0xf]
        %v1283 = vld [vmem:[#allocation8 + $0xf0] sm:$0xf]
        %v1284 = vld [vmem:[#allocation8 + $0xf4] sm:$0xf]
        %v1285 = vld [vmem:[#allocation8 + $0xf8] sm:$0xf]
        %v1286 = vld [vmem:[#allocation8 + $0xfc] sm:$0xf]
        %v1287 = vpack.c.bf16 %v1267, %v1266
        %v1288 = vpack.c.bf16 %v1269, %v1268
        %v1289 = vpack.c.bf16 %v1270, %v1270
        %v1290 = vld [vmem:[%s4] sm:$0x2]
        %v1291 = vunpack.c.l.bf16 %v1290
        %v1292 = vlaneseq
        %v1293 = vshrl.u32 %v1292, 7
        %v1294 = vsub.s32 3, %v1293
        %v1295 = vrot.slane %v1291, %v1294
        %v1312 = vunpack.c.l.b16 %v1271
        %v1313 = vunpack.c.l.b16 %v1272
        %v1314 = vunpack.c.l.b16 %v1273
        %v1315 = vunpack.c.l.b16 %v1274
        %v1316 = vunpack.c.l.b16 %v1275
        %v1317 = vunpack.c.l.b16 %v1276
        %v1318 = vunpack.c.l.b16 %v1277
        %v1319 = vunpack.c.l.b16 %v1278
        %v1320 = vunpack.c.l.b16 %v1279
        %v1321 = vunpack.c.l.b16 %v1280
        %v1322 = vunpack.c.l.b16 %v1281
        %v1323 = vunpack.c.l.b16 %v1282
        %v1324 = vunpack.c.l.b16 %v1283
        %v1325 = vunpack.c.l.b16 %v1284
        %v1326 = vunpack.c.l.b16 %v1285
        %v1327 = vunpack.c.l.b16 %v1286
        %v1328 = vpack.c.b16 %v1313, %v1312
        %v1329 = vpack.c.b16 %v1315, %v1314
        %v1330 = vpack.c.b16 %v1317, %v1316
        %v1331 = vpack.c.b16 %v1319, %v1318
        %v1332 = vpack.c.b16 %v1321, %v1320
        %v1333 = vpack.c.b16 %v1323, %v1322
        %v1334 = vpack.c.b16 %v1325, %v1324
        %v1335 = vpack.c.b16 %v1327, %v1326
        %1344 = vmatprep.subr.bf16.mxu0 0
        %1345 = vmatpush1.bf16.msra.mxu0 %v1328
        %1346 = vmatprep.subr.bf16.mxu0 0
        %1347 = vmatpush1.bf16.msra.mxu0 %v1329
        %1348 = vmatprep.subr.bf16.mxu0 0
        %1349 = vmatpush1.bf16.msra.mxu0 %v1330
        %1350 = vmatprep.subr.bf16.mxu0 0
        %1351 = vmatpush1.bf16.msra.mxu0 %v1331
        %1352 = vmatprep.subr.bf16.mxu0 0
        %1353 = vmatpush1.bf16.msra.mxu0 %v1332
        %1354 = vmatprep.subr.bf16.mxu0 0
        %1355 = vmatpush1.bf16.msra.mxu0 %v1333
        %1356 = vmatprep.subr.bf16.mxu0 0
        %1357 = vmatpush1.bf16.msra.mxu0 %v1334
        %1358 = vmatprep.subr.bf16.mxu0 0
        %1359 = vmatpush1.bf16.msra.mxu0 %v1335
        %1360 = vmatprep.subr.bf16.mxu0 0
        %1361 = vmatpush1.bf16.msra.mxu0 0
        %1362 = vmatprep.subr.bf16.mxu0 0
        %1363 = vmatpush1.bf16.msra.mxu0 0
        %1364 = vmatprep.subr.bf16.mxu0 0
        %1365 = vmatpush1.bf16.msra.mxu0 0
        %1366 = vmatprep.subr.bf16.mxu0 0
        %1367 = vmatpush1.bf16.msra.mxu0 0
        %1368 = vmatprep.subr.bf16.mxu0 0
        %1369 = vmatpush1.bf16.msra.mxu0 0
        %1370 = vmatprep.subr.bf16.mxu0 0
        %1371 = vmatpush1.bf16.msra.mxu0 0
        %1372 = vmatprep.subr.bf16.mxu0 0
        %1373 = vmatpush1.bf16.msra.mxu0 0
        %1374 = vmatprep.subr.bf16.mxu0 0
        %1375 = vmatpush1.bf16.msra.mxu0 0
        %1376 = vmatprep.mubr.bf16.mxu0 0
        %1377 = vmatmul.mubr.bf16.gmra.mrb[0].mxu0 %v1287
        %v1378 = vpop.f32.mrb[0].mxu0
        %v1379 = vadd.f32 %v1295, %v1378
        %v1380 = vpop.f32.mrb[0].mxu0
        %v1381 = vpop.f32.mrb[0].mxu0
        %v1382 = vadd.f32 %v1295, %v1381
        %v1383 = vpop.f32.mrb[0].mxu0
        %1384 = vmatprep.mubr.bf16.mxu0 0
        %1385 = vmatmul.mubr.bf16.gmra.mrb[0].mxu0 %v1288
        %v1386 = vpop.f32.mrb[0].mxu0
        %v1387 = vadd.f32 %v1295, %v1386
        %v1388 = vpop.f32.mrb[0].mxu0
        %v1389 = vpop.f32.mrb[0].mxu0
        %v1390 = vadd.f32 %v1295, %v1389
        %v1391 = vpop.f32.mrb[0].mxu0
        %1392 = vmatprep.mubr.bf16.mxu0 0
        %1393 = vmatmul.mubr.bf16.gmra.mrb[0].mxu0 %v1289
        %v1394 = vpop.f32.mrb[0].mxu0
        %v1395 = vadd.f32 %v1295, %v1394
        %v1396 = vpop.f32.mrb[0].mxu0
        %v1397 = vpop.f32.mrb[0].mxu0
        %v1398 = vpop.f32.mrb[0].mxu0
        %1399 = vdwg.mxu0
        %v1400 = vld [vmem:[%s399] sm:$0xf]
        %v1401 = vld [vmem:[%s399 + $0x4] sm:$0xf]
        %v1402 = vld [vmem:[%s399 + $0x8] sm:$0xf]
        %v1403 = vld [vmem:[%s399 + $0xc] sm:$0xf]
        %v1404 = vld [vmem:[%s399 + $0x10] sm:$0xf]
        %v1405 = vunpack.c.l.bf16 %v1400
        %v1406 = vunpack.c.l.bf16 %v1401
        %v1407 = vunpack.c.l.bf16 %v1402
        %v1408 = vunpack.c.l.bf16 %v1403
        %v1409 = vunpack.c.l.bf16 %v1404
        %v1410 = vadd.f32 %v1379, %v1405
        %v1411 = vadd.f32 %v1382, %v1406
        %v1412 = vadd.f32 %v1387, %v1407
        %v1413 = vadd.f32 %v1390, %v1408
        %v1414 = vadd.f32 %v1395, %v1409
        %v1415 = vmax.f32 %v1410, %v1414
        %v1416 = vmax.f32 %v1415, %v1411
        %v1417 = vmax.f32 %v1412, %v1413
        %v1418 = vmax.f32 %v1416, %v1417
        %v1419 = vrot.slane %v1418, 4
        %v1420 = vmax.f32 %v1418, %v1419
        %v1421 = vrot.slane %v1420, 2
        %v1422 = vmax.f32 %v1420, %v1421
        %v1423 = vrot.slane %v1422, 1
        %v1424 = vmax.f32 %v1422, %v1423
        %v1425 = vsub.f32 %v1410, %v1424
        %v1426 = vsub.f32 %v1411, %v1424
        %v1427 = vsub.f32 %v1412, %v1424
        %v1428 = vsub.f32 %v1413, %v1424
        %v1429 = vsub.f32 %v1414, %v1424
        %v1430 = vmul.f32 %v1425, 1.442695
        %v1431 = vpow.pop %v1430
        %v1432 = vmul.f32 %v1426, 1.442695
        %v1433 = vpow.pop %v1432
        %v1434 = vmul.f32 %v1427, 1.442695
        %v1435 = vpow.pop %v1434
        %v1436 = vmul.f32 %v1428, 1.442695
        %v1437 = vpow.pop %v1436
        %v1438 = vmul.f32 %v1429, 1.442695
        %v1439 = vpow.pop %v1438
        %v1440 = vadd.f32 %v1431, %v1433
        %v1441 = vadd.f32 %v1440, %v1435
        %v1442 = vadd.f32 %v1441, %v1437
        %v1443 = vadd.f32 %v1442, %v1439
        %v1444 = vrot.slane %v1443, 4
        %v1445 = vadd.f32 %v1443, %v1444
        %v1446 = vrot.slane %v1445, 2
        %v1447 = vadd.f32 %v1445, %v1446
        %v1448 = vrot.slane %v1447, 1
        %v1449 = vadd.f32 %v1447, %v1448
        %v1450 = vrcp.pop %v1449
        %v1451 = vmul.f32 %v1431, %v1450
        %v1452 = vmul.f32 %v1433, %v1450
        %v1453 = vmul.f32 %v1435, %v1450
        %v1454 = vmul.f32 %v1437, %v1450
        %v1455 = vmul.f32 %v1439, %v1450
        %v1456 = vld [vmem:[%s6 + $0x28] sm:$0xf]
        %v1457 = vld [vmem:[%s6 + $0x2c] sm:$0xf]
        %v1458 = vld [vmem:[%s6 + $0x30] sm:$0xf]
        %v1459 = vld [vmem:[%s6 + $0x34] sm:$0xf]
        %v1460 = vld [vmem:[%s6 + $0x38] sm:$0xf]
        %v1461 = vunpack.c.l.bf16 %v1456
        %v1462 = vunpack.c.l.bf16 %v1457
        %v1463 = vunpack.c.l.bf16 %v1458
        %v1464 = vunpack.c.l.bf16 %v1459
        %v1465 = vunpack.c.l.bf16 %v1460
        %v1466 = vmul.f32 %v1461, %v1266
        %v1467 = vmul.f32 %v1462, %v1267
        %v1468 = vmul.f32 %v1463, %v1268
        %v1469 = vmul.f32 %v1464, %v1269
        %v1470 = vmul.f32 %v1465, %v1270
        %v1471 = vadd.f32 %v1466, %v1467
        %v1472 = vadd.f32 %v1471, %v1468
        %v1473 = vadd.f32 %v1472, %v1469
        %v1474 = vadd.f32 %v1473, %v1470
        %v1475 = vrot.slane %v1474, 4
        %v1476 = vadd.f32 %v1474, %v1475
        %v1477 = vrot.slane %v1476, 2
        %v1478 = vadd.f32 %v1476, %v1477
        %v1479 = vrot.slane %v1478, 1
        %v1480 = vadd.f32 %v1478, %v1479
        %v1481 = vld [vmem:[%s4] sm:$0x4]
        %v1482 = vunpack.c.l.bf16 %v1481
        %v1483 = vadd.f32 %v1480, %v1482
        %vm1484 = vcmask 1044484
        %v1485 = vsel %vm1484, %v1483, -inf
        %1486 = vmax.xlane.f32.xlu0 %v1485
        %v1487 = vpop.xlane.xlu0 %1486
        %v1488 = vsub.f32 %v1483, %v1487
        %v1489 = vmul.f32 %v1488, 1.442695
        %v1490 = vpow.pop %v1489
        %v1491 = vld [vmem:[#allocation8 + $0x100] sm:$0xf]
        %v1492 = vld [vmem:[#allocation8 + $0x104] sm:$0xf]
        %v1493 = vld [vmem:[#allocation8 + $0x108] sm:$0xf]
        %v1494 = vld [vmem:[#allocation8 + $0x10c] sm:$0xf]
        %v1495 = vld [vmem:[#allocation8 + $0x110] sm:$0xf]
        %v1496 = vld [vmem:[#allocation8 + $0x114] sm:$0xf]
        %v1497 = vld [vmem:[#allocation8 + $0x118] sm:$0xf]
        %v1498 = vld [vmem:[#allocation8 + $0x11c] sm:$0xf]
        %v1499 = vld [vmem:[#allocation8 + $0x120] sm:$0xf]
        %v1500 = vld [vmem:[#allocation8 + $0x124] sm:$0xf]
        %v1501 = vld [vmem:[#allocation8 + $0x128] sm:$0xf]
        %v1502 = vld [vmem:[#allocation8 + $0x12c] sm:$0xf]
        %v1503 = vld [vmem:[#allocation8 + $0x130] sm:$0xf]
        %v1504 = vld [vmem:[#allocation8 + $0x134] sm:$0xf]
        %v1505 = vld [vmem:[#allocation8 + $0x138] sm:$0xf]
        %v1506 = vld [vmem:[#allocation8 + $0x13c] sm:$0xf]
        %v1507 = vpack.c.bf16 %v1490, %v1490
        %v1509 = vrot.slane %v1507, 2
        %v1527 = vunpack.c.l.b16 %v1491
        %v1528 = vunpack.c.l.b16 %v1492
        %v1529 = vunpack.c.l.b16 %v1493
        %v1530 = vunpack.c.l.b16 %v1494
        %v1531 = vunpack.c.l.b16 %v1495
        %v1532 = vunpack.c.l.b16 %v1496
        %v1533 = vunpack.c.l.b16 %v1497
        %v1534 = vunpack.c.l.b16 %v1498
        %v1535 = vunpack.c.l.b16 %v1499
        %v1536 = vunpack.c.l.b16 %v1500
        %v1537 = vunpack.c.l.b16 %v1501
        %v1538 = vunpack.c.l.b16 %v1502
        %v1539 = vunpack.c.l.b16 %v1503
        %v1540 = vunpack.c.l.b16 %v1504
        %v1541 = vunpack.c.l.b16 %v1505
        %v1542 = vunpack.c.l.b16 %v1506
        %v1543 = vpack.c.b16 %v1528, %v1527
        %v1544 = vpack.c.b16 %v1530, %v1529
        %v1545 = vpack.c.b16 %v1532, %v1531
        %v1546 = vpack.c.b16 %v1534, %v1533
        %v1547 = vpack.c.b16 %v1536, %v1535
        %v1548 = vpack.c.b16 %v1538, %v1537
        %v1549 = vpack.c.b16 %v1540, %v1539
        %v1550 = vpack.c.b16 %v1542, %v1541
        %1559 = vmatprep.subr.bf16.mxu0 0
        %1560 = vmatpush1.bf16.msra.mxu0 %v1543
        %1561 = vmatprep.subr.bf16.mxu0 0
        %1562 = vmatpush1.bf16.msra.mxu0 %v1544
        %1563 = vmatprep.subr.bf16.mxu0 0
        %1564 = vmatpush1.bf16.msra.mxu0 %v1545
        %1565 = vmatprep.subr.bf16.mxu0 0
        %1566 = vmatpush1.bf16.msra.mxu0 %v1546
        %1567 = vmatprep.subr.bf16.mxu0 0
        %1568 = vmatpush1.bf16.msra.mxu0 %v1547
        %1569 = vmatprep.subr.bf16.mxu0 0
        %1570 = vmatpush1.bf16.msra.mxu0 %v1548
        %1571 = vmatprep.subr.bf16.mxu0 0
        %1572 = vmatpush1.bf16.msra.mxu0 %v1549
        %1573 = vmatprep.subr.bf16.mxu0 0
        %1574 = vmatpush1.bf16.msra.mxu0 %v1550
        %1575 = vmatprep.subr.bf16.mxu0 0
        %1576 = vmatpush1.bf16.msra.mxu0 0
        %1577 = vmatprep.subr.bf16.mxu0 0
        %1578 = vmatpush1.bf16.msra.mxu0 0
        %1579 = vmatprep.subr.bf16.mxu0 0
        %1580 = vmatpush1.bf16.msra.mxu0 0
        %1581 = vmatprep.subr.bf16.mxu0 0
        %1582 = vmatpush1.bf16.msra.mxu0 0
        %1583 = vmatprep.subr.bf16.mxu0 0
        %1584 = vmatpush1.bf16.msra.mxu0 0
        %1585 = vmatprep.subr.bf16.mxu0 0
        %1586 = vmatpush1.bf16.msra.mxu0 0
        %1587 = vmatprep.subr.bf16.mxu0 0
        %1588 = vmatpush1.bf16.msra.mxu0 0
        %1589 = vmatprep.subr.bf16.mxu0 0
        %1590 = vmatpush1.bf16.msra.mxu0 0
        %1591 = vmatprep.mubr.bf16.mxu0 0
        %1592 = vmatmul.mubr.bf16.gmra.mrb[0].mxu0 %v1509
        %v1593 = vpop.f32.mrb[0].mxu0
        %v1594 = vadd.f32 0.0, %v1593
        %v1595 = vpop.f32.mrb[0].mxu0
        %v1596 = vpop.f32.mrb[0].mxu0
        %v1597 = vpop.f32.mrb[0].mxu0
        %1598 = vdwg.mxu0
        %v1599 = vrcp.pop %v1594
        %v1601 = vrot.slane %v1599, 4
        %v1603 = vmul.f32 %v1490, %v1601
        %v1604 = vlaneseq
        %v1605 = vshrl.u32 %v1604, 7
        %v1606 = vsub.s32 4, %v1605
        %v1607 = vrot.slane %v1603, %v1606
        %v1608 = vadd.f32 %v1451, %v1607
        %v1609 = vadd.f32 %v1452, %v1607
        %v1610 = vadd.f32 %v1453, %v1607
        %v1611 = vadd.f32 %v1454, %v1607
        %v1612 = vadd.f32 %v1455, %v1607
        %v1613 = vmul.f32 %v1608, %v838
        %v1614 = vmul.f32 %v1609, %v841
        %v1615 = vmul.f32 %v1610, %v846
        %v1616 = vmul.f32 %v1611, %v849
        %v1617 = vmul.f32 %v1612, %v854
        %1618 = vst [vmem:[%s443] sm:$0xff] %v1613
        %1619 = vst [vmem:[%s443 + $0x8] sm:$0xff] %v1614
        %1620 = vst [vmem:[%s443 + $0x10] sm:$0xff] %v1615
        %1621 = vst [vmem:[%s443 + $0x18] sm:$0xff] %v1616
        %1622 = vst [vmem:[%s443 + $0x20] sm:$0xff] %v1617
        %s1623 = sand.u32 %s204, 1
        %s1624 = scalar_lea.sflag [#allocation4], %s1623
        %s1625 = sand.u32 %s204, 1
        %s1626 = smul.addr %s1625, 40
        %s1627 = scalar_lea.vmem [#allocation10], %s1626
        %s1628 = sand.u32 %s34, 1
        %s1629 = scalar_lea.sflag [#allocation12], %s1628
        %s1630 = sand.u32 %s230, 1
        %s1631 = smul.addr %s1630, 40
        %s1632 = scalar_lea.vmem [#allocation11], %s1631
        %s1633 = sand.u32 %s34, 1
        %s1634 = scalar_lea.sflag [#allocation12], %s1633
        %s1635 = sand.u32 %s256, 1
        %s1636 = smul.addr %s1635, 40
        %s1637 = scalar_lea.vmem [#allocation13], %s1636
        // Predicated region
        $region65: #{tpu_custom_call.1} parent=47 // pred_check
          %p1638 = pneg %p214
        $region66: #{tpu_custom_call.1} parent=47 // pred_check_branch
          %1640 = sbr.rel (%p1638) target = $region68
        $region67: #{tpu_custom_call.1} parent=47 // pred_region
          %s1642 = ssub.s32 640, 640
          %1643 = vsyncadd %s1624, %s1642
          %s1644 = smul.addr %s34, 128
          %s1645 = scalar_lea.hbm %s7, %s1644
          %s1646 = sshll.u32 %s1627, 4
          %s1647 = int_to_ptr.vmem [resolvable:$true] %s1646
          %1652 = dma.vmem_to_hbm [thread:$0]  %s1647, 640, %s1645, %s1624, 128, 256, 8
        $region68: #{tpu_custom_call.1} parent=47 // pred_fallthru
          _
        // Predicated region
        $region69: #{tpu_custom_call.1} parent=47 // pred_check
          %p1653 = pneg %p240
        $region70: #{tpu_custom_call.1} parent=47 // pred_check_branch
          %1655 = sbr.rel (%p1653) target = $region72
        $region71: #{tpu_custom_call.1} parent=47 // pred_region
          %s1657 = ssub.s32 640, 640
          %1658 = vsyncadd %s1629, %s1657
          %s1659 = smul.addr %s34, 128
          %s1660 = scalar_lea.hbm %s8, %s1659
          %s1661 = sshll.u32 %s1632, 4
          %s1662 = int_to_ptr.vmem [resolvable:$true] %s1661
          %1667 = dma.vmem_to_hbm [thread:$0]  %s1662, 640, %s1660, %s1629, 128, 256, 8
        $region72: #{tpu_custom_call.1} parent=47 // pred_fallthru
          _
        // Predicated region
        $region73: #{tpu_custom_call.1} parent=47 // pred_check
          %p1668 = pneg %p266
        $region74: #{tpu_custom_call.1} parent=47 // pred_check_branch
          %1670 = sbr.rel (%p1668) target = $region76
        $region75: #{tpu_custom_call.1} parent=47 // pred_region
          %s1672 = ssub.s32 640, 640
          %1673 = vsyncadd %s1634, %s1672
          %s1674 = smul.addr %s34, 128
          %s1675 = scalar_lea.hbm %s9, %s1674
          %s1676 = sshll.u32 %s1637, 4
          %s1677 = int_to_ptr.vmem [resolvable:$true] %s1676
          %1682 = dma.vmem_to_hbm [thread:$0]  %s1677, 640, %s1675, %s1634, 128, 256, 8
        $region76: #{tpu_custom_call.1} parent=47 // pred_fallthru
          _
      $region48: #{tpu_custom_call.1} parent=5 // pred_fallthru
        _
      %p1683 = scmp.le.s32.totalorder 2, %s29
      // Predicated region
      $region77: #{tpu_custom_call.1} parent=5 // pred_check
        %p1684 = pneg %p1683
      $region78: #{tpu_custom_call.1} parent=5 // pred_check_branch
        %1686 = sbr.rel (%p1684) target = $region80
      $region79: #{tpu_custom_call.1} parent=5 // pred_region
        %s1687 = ssub.s32 %s29, 2
        // Predicated region
        $region81: #{tpu_custom_call.1} parent=79 // pred_check
          %p1688 = pneg %p220
        $region82: #{tpu_custom_call.1} parent=79 // pred_check_branch
          %1690 = sbr.rel (%p1688) target = $region84
        $region83: #{tpu_custom_call.1} parent=79 // pred_region
          %s1691 = sand.u32 %s205, 1
          %s1692 = scalar_lea.sflag [#allocation4], %s1691
          %s1693 = sand.u32 %s205, 1
          %s1694 = smul.addr %s1693, 40
          %s1695 = scalar_lea.vmem [#allocation10], %s1694
          %1696 = dma.done %s1692, 640
        $region84: #{tpu_custom_call.1} parent=79 // pred_fallthru
          _
        // Predicated region
        $region85: #{tpu_custom_call.1} parent=79 // pred_check
          %p1697 = pneg %p246
        $region86: #{tpu_custom_call.1} parent=79 // pred_check_branch
          %1699 = sbr.rel (%p1697) target = $region88
        $region87: #{tpu_custom_call.1} parent=79 // pred_region
          %s1700 = sand.u32 %s35, 1
          %s1701 = scalar_lea.sflag [#allocation12], %s1700
          %s1702 = sand.u32 %s231, 1
          %s1703 = smul.addr %s1702, 40
          %s1704 = scalar_lea.vmem [#allocation11], %s1703
          %1705 = dma.done %s1701, 640
        $region88: #{tpu_custom_call.1} parent=79 // pred_fallthru
          _
        // Predicated region
        $region89: #{tpu_custom_call.1} parent=79 // pred_check
          %p1706 = pneg %p272
        $region90: #{tpu_custom_call.1} parent=79 // pred_check_branch
          %1708 = sbr.rel (%p1706) target = $region92
        $region91: #{tpu_custom_call.1} parent=79 // pred_region
          %s1709 = sand.u32 %s35, 1
          %s1710 = scalar_lea.sflag [#allocation12], %s1709
          %s1711 = sand.u32 %s257, 1
          %s1712 = smul.addr %s1711, 40
          %s1713 = scalar_lea.vmem [#allocation13], %s1712
          %1714 = dma.done %s1710, 640
        $region92: #{tpu_custom_call.1} parent=79 // pred_fallthru
          _
      $region80: #{tpu_custom_call.1} parent=5 // pred_fallthru
        _
    $region6: #{tpu_custom_call.1} parent=1 // loop_footer
      %s33 = sadd.s32 1, %s29
    $region7: #{tpu_custom_call.1} parent=1 // loop_footer_branch
      %28 = sbr.rel target = $region3
    $region8: #{tpu_custom_call.1} parent=1 // loop_exit
      _
    %1715 = vsyncpa [#allocation3], 1
    %s1716 = scalar_lea.sflag [#allocation3], 1
    %1717 = vsyncpa %s1716, 1
    %1718 = vsyncpa [#allocation6], 1
    %s1719 = scalar_lea.sflag [#allocation6], 1
    %1720 = vsyncpa %s1719, 1
    %1721 = vsyncpa [#allocation9], 1
    %1722 = vsyncpa [#allocation4], 1
    %s1723 = scalar_lea.sflag [#allocation4], 1
    %1724 = vsyncpa %s1723, 1
    %1725 = vsyncpa [#allocation12], 1
    %s1726 = scalar_lea.sflag [#allocation12], 1
    %1727 = vsyncpa %s1726, 1

</llo_original>
